<compile_context>
chip_gen: v7x
topology: tpu7x:2x2x1
jax: 0.10.0
libtpu: 0.0.40
codegen_flags: <defaults>
</compile_context>

<pallas_src>
import jax
import jax.numpy as jnp
from jax import lax
from jax.experimental import pallas as pl
from jax.experimental.pallas import tpu as pltpu


# ----------------------------- fused Pallas kernel ---------------------------

def _make_kernel(H, W, ksize_f, small_res):
    """Builds the fused residual-block kernel body (one image per grid step)."""
    HW = H * W
    pad_f = (ksize_f - 1) // 2

    def row_col_idx():
        # Flat-position row/col indices, (1, HW) int32, lane-dense.
        idx = lax.broadcasted_iota(jnp.int32, (1, HW), 1)
        if (W & (W - 1)) == 0:                       # power-of-two width: avoid div
            col = jnp.bitwise_and(idx, W - 1)
            row = jnp.right_shift(idx, W.bit_length() - 1)
        else:
            col = idx % W
            row = idx // W
        return row, col

    def shifted_stack(img, row, col, ksize, pad, out_dtype):
        """Stack the k*k spatially shifted (zero-padded) copies of img (C, HW)
        into a (k*k*C, HW) RHS for a single fused-K MXU dot."""
        parts = []
        for ky in range(ksize):
            for kx in range(ksize):
                di, dj = ky - pad, kx - pad          # output (i,j) reads x(i+di, j+dj)
                off = di * W + dj
                if off == 0:
                    shifted = img
                else:
                    # shifted[p] = img[p + off]  (wrap-around lands on masked slots)
                    shifted = pltpu.roll(img, shift=(-off) % HW, axis=1)
                if di != 0 or dj != 0:
                    valid = ((row >= -di) & (row < H - di) &
                             (col >= -dj) & (col < W - dj))
                    shifted = jnp.where(valid, shifted, 0.0)
                parts.append(shifted)
        return jnp.concatenate(parts, axis=0).astype(out_dtype)

    def conv(img, row, col, w_ref, b_ref, ksize, pad):
        """k x k conv of img (Cin, HW) -> (Cout, HW) as ONE MXU dot, f32 accum."""
        w = w_ref[...]                               # (Cout, k*k*Cin), f32 or bf16
        stk = shifted_stack(img, row, col, ksize, pad, w.dtype)
        return jnp.dot(w, stk, preferred_element_type=jnp.float32) + b_ref[...]

    def prelu(h, a):
        return jnp.where(h >= 0, h, a * h)

    if small_res:
        def kernel(alpha_ref, x_ref, w1_ref, b1_ref, wf_ref, bf_ref, o_ref):
            row, col = row_col_idx()
            x = x_ref[0].astype(jnp.float32)                       # (C, HW)
            h = conv(x, row, col, w1_ref, b1_ref, 3, 1)            # body (single conv)
            h = prelu(h, alpha_ref[1])                             # self.nonlinear
            # res_scale already folded into wf/bf
            out = conv(h, row, col, wf_ref, bf_ref, ksize_f, pad_f) + x
            o_ref[0] = out.astype(o_ref.dtype)                     # lane-dense store
    else:
        def kernel(alpha_ref, x_ref, w1_ref, b1_ref, w2_ref, b2_ref,
                   wf_ref, bf_ref, o_ref):
            row, col = row_col_idx()
            x = x_ref[0].astype(jnp.float32)                       # (C, HW)
            h = conv(x, row, col, w1_ref, b1_ref, 3, 1)            # body conv 1
            h = prelu(h, alpha_ref[0])                             # body PReLU
            h = conv(h, row, col, w2_ref, b2_ref, 3, 1)            # body conv 2
            h = prelu(h, alpha_ref[1])                             # self.nonlinear
            out = conv(h, row, col, wf_ref, bf_ref, ksize_f, pad_f) + x
            o_ref[0] = out.astype(o_ref.dtype)                     # lane-dense store

    return kernel


# ----------------------------- forward wrapper -------------------------------

def _weight_2d(w_oihw, scale, dtype):
    """PyTorch (Cout,Cin,kH,kW) conv weight -> 2-D (Cout, kH*kW*Cin) matrix whose
    K index matches the tap-major / channel-minor stacked RHS built in-kernel."""
    co, ci, kh, kw = w_oihw.shape
    w = jnp.transpose(w_oihw.astype(jnp.float32), (0, 2, 3, 1))    # (Cout,kH,kW,Cin)
    return (w.reshape(co, kh * kw * ci) * scale).astype(dtype)


def residual_block_forward(x_nchw, params, *, kernel_size=3, res_scale=0.1,
                           small_res=False, use_bf16=False):
    """Forward pass of ResidualBlock. x is NCHW, returns NCHW (PyTorch layout)."""
    N, C, H, W = x_nchw.shape
    HW = H * W
    cdt = jnp.bfloat16 if use_bf16 else jnp.float32

    c_out = params["wf"].shape[0]
    assert c_out == C, "residual add requires in_channels == out_channels"
    assert params["w1"].shape[0] == c_out and params["w1"].shape[1] == C
    ksize_f = params["wf"].shape[2]
    assert ksize_f == kernel_size

    # Free metadata reshape only (NCHW -> (N, C, HW)); layout stays channel-major,
    # so no transpose pass is needed anywhere (wrapper or kernel).
    x_flat = x_nchw.reshape(N, C, HW).astype(jnp.float32)

    a_body = params.get("a_body", params["a_nl"])[0]
    alphas = jnp.stack([a_body, params["a_nl"][0]]).astype(jnp.float32)

    w1 = _weight_2d(params["w1"], 1.0, cdt)
    b1 = params["b1"].reshape(-1, 1).astype(jnp.float32)
    # Fold res_scale into the final conv (removes a VPU mul and an operand).
    wf = _weight_2d(params["wf"], res_scale, cdt)
    bf = (params["bf"].astype(jnp.float32) * res_scale).reshape(-1, 1)

    kernel = _make_kernel(H, W, ksize_f, small_res)

    in_specs = [
        pl.BlockSpec(memory_space=pltpu.MemorySpace.SMEM),       # PReLU slopes (2,)
        pl.BlockSpec((1, C, HW), lambda n: (n, 0, 0)),           # x, one image/step
        pl.BlockSpec(w1.shape, lambda n: (0, 0)),                # w1 (Cout, 9*Cin)
        pl.BlockSpec(b1.shape, lambda n: (0, 0)),                # b1 (Cout, 1)
    ]
    args = [alphas, x_flat, w1, b1]
    if not small_res:
        w2 = _weight_2d(params["w2"], 1.0, cdt)
        b2 = params["b2"].reshape(-1, 1).astype(jnp.float32)
        in_specs += [pl.BlockSpec(w2.shape, lambda n: (0, 0)),
                     pl.BlockSpec(b2.shape, lambda n: (0, 0))]
        args += [w2, b2]
    in_specs += [pl.BlockSpec(wf.shape, lambda n: (0, 0)),
                 pl.BlockSpec(bf.shape, lambda n: (0, 0))]
    args += [wf, bf]

    out = pl.pallas_call(
        kernel,
        out_shape=jax.ShapeDtypeStruct((N, c_out, HW), jnp.float32),
        grid_spec=pltpu.PrefetchScalarGridSpec(
            num_scalar_prefetch=0,
            grid=(N,),
            in_specs=in_specs,
            out_specs=pl.BlockSpec((1, c_out, HW), lambda n: (n, 0, 0)),
        ),
        compiler_params=pltpu.CompilerParams(
            # Batch axis is independent -> both v7x TensorCores get work.
            dimension_semantics=("parallel",),
            # Per-step footprint is a few KiB; 32 MiB fits every generation
            # (including v7x's 64 MiB per-TC VMEM).
            vmem_limit_bytes=32 * 1024 * 1024,
        ),
    )(*args)

    return out.reshape(N, c_out, H, W)           # free metadata reshape


# ----------------------------- pure-JAX reference ----------------------------

def _reference_forward(x, params, *, kernel_size=3, res_scale=0.1,
                       small_res=False):
    def conv(inp, w, b, pad):
        y = lax.conv_general_dilated(
            inp, w, (1, 1), [(pad, pad), (pad, pad)],
            dimension_numbers=("NCHW", "OIHW", "NCHW"))
        return y + b.reshape(1, -1, 1, 1)

    def prelu(y, a):
        return jnp.where(y >= 0, y, a * y)

    h = conv(x, params["w1"], params["b1"], 1)
    if not small_res:
        h = prelu(h, params["a_body"][0])
        h = conv(h, params["w2"], params["b2"], 1)
    h = prelu(h, params["a_nl"][0])
    o = conv(h, params["wf"], params["bf"], (kernel_size - 1) // 2) * res_scale
    return o + x


# ----------------------------------- main -------------------------------------

if __name__ == "__main__":
    N, C, H, W = 2, 4, 16, 16        # in_channels == out_channels (residual add)
    kernel_size, res_scale = 3, 0.1

    key = jax.random.PRNGKey(0)
    ks = jax.random.split(key, 8)
    params = {
        "w1": 0.1 * jax.random.normal(ks[0], (C, C, 3, 3), jnp.float32),
        "b1": 0.1 * jax.random.normal(ks[1], (C,), jnp.float32),
        "w2": 0.1 * jax.random.normal(ks[2], (C, C, 3, 3), jnp.float32),
        "b2": 0.1 * jax.random.normal(ks[3], (C,), jnp.float32),
        "wf": 0.1 * jax.random.normal(ks[4], (C, C, kernel_size, kernel_size),
                                      jnp.float32),
        "bf": 0.1 * jax.random.normal(ks[5], (C,), jnp.float32),
        "a_body": jnp.asarray([0.25], jnp.float32),   # nn.PReLU() default init
        "a_nl": jnp.asarray([0.25], jnp.float32),     # nn.PReLU() default init
    }
    x = jax.random.normal(ks[6], (N, C, H, W), jnp.float32)

    # Main config: small_res=False (body = conv -> PReLU -> conv), f32 operands.
    ref = _reference_forward(x, params, kernel_size=kernel_size,
                             res_scale=res_scale, small_res=False)
    out = residual_block_forward(x, params, kernel_size=kernel_size,
                                 res_scale=res_scale, small_res=False)
    out = jax.block_until_ready(out)
    assert out.shape == (N, C, H, W)
    assert jnp.allclose(out, ref, atol=2e-3, rtol=2e-3), "mismatch (small_res=False)"

    # small_res=True body (single conv).
    ref_s = _reference_forward(x, params, kernel_size=kernel_size,
                               res_scale=res_scale, small_res=True)
    out_s = residual_block_forward(x, params, kernel_size=kernel_size,
                                   res_scale=res_scale, small_res=True)
    out_s = jax.block_until_ready(out_s)
    assert jnp.allclose(out_s, ref_s, atol=2e-3, rtol=2e-3), "mismatch (small_res=True)"

    # bf16 MXU-operand path (recommended on v6e/v7x), widened tolerance.
    out_b = residual_block_forward(x, params, kernel_size=kernel_size,
                                   res_scale=res_scale, small_res=False,
                                   use_bf16=True)
    out_b = jax.block_until_ready(out_b)
    assert jnp.allclose(out_b, ref, atol=2e-2, rtol=2e-2), "mismatch (use_bf16=True)"

    print("KERNEL_OK")
</pallas_src>

<mosaic_0001>
module attributes {stable_mosaic.version = 11 : i64} {
  func.func @kernel(%arg0: i32, %arg1: memref<2xf32, #tpu.memory_space<smem>>, %arg2: memref<1x4x256xf32, #tpu.memory_space<vmem>>, %arg3: memref<4x36xf32, #tpu.memory_space<vmem>>, %arg4: memref<4x1xf32, #tpu.memory_space<vmem>>, %arg5: memref<4x36xf32, #tpu.memory_space<vmem>>, %arg6: memref<4x1xf32, #tpu.memory_space<vmem>>, %arg7: memref<4x36xf32, #tpu.memory_space<vmem>>, %arg8: memref<4x1xf32, #tpu.memory_space<vmem>>, %arg9: memref<1x4x256xf32, #tpu.memory_space<vmem>>) attributes {dimension_semantics = [#tpu.dimension_semantics<parallel>], iteration_bounds = array<i64: 2>, scalar_prefetch = 0 : i64, scratch_operands = 0 : i64, tpu.core_type = #tpu.core_type<tc>, window_params = [{transform_indices = @transform_0, window_bounds = array<i64: 2>}, {transform_indices = @transform_1, window_bounds = array<i64: 1, 4, 256>}, {pipeline_mode = #tpu.pipeline_mode<synchronous>, transform_indices = @transform_2, window_bounds = array<i64: 4, 36>}, {pipeline_mode = #tpu.pipeline_mode<synchronous>, transform_indices = @transform_3, window_bounds = array<i64: 4, 1>}, {pipeline_mode = #tpu.pipeline_mode<synchronous>, transform_indices = @transform_4, window_bounds = array<i64: 4, 36>}, {pipeline_mode = #tpu.pipeline_mode<synchronous>, transform_indices = @transform_5, window_bounds = array<i64: 4, 1>}, {pipeline_mode = #tpu.pipeline_mode<synchronous>, transform_indices = @transform_6, window_bounds = array<i64: 4, 36>}, {pipeline_mode = #tpu.pipeline_mode<synchronous>, transform_indices = @transform_7, window_bounds = array<i64: 4, 1>}, {transform_indices = @transform_8, window_bounds = array<i64: 1, 4, 256>}]} {
    %0 = tpu.iota {dimensions = array<i32: 1>} : vector<1x256xi32>
    %c15_i32 = arith.constant 15 : i32
    %1 = vector.broadcast %c15_i32 : i32 to vector<1x256xi32>
    %2 = arith.andi %0, %1 : vector<1x256xi32>
    %c4_i32 = arith.constant 4 : i32
    %3 = vector.broadcast %c4_i32 : i32 to vector<1x256xi32>
    %4 = arith.shrsi %0, %3 : vector<1x256xi32>
    %c0 = arith.constant 0 : index
    %c0_0 = arith.constant 0 : index
    %c0_1 = arith.constant 0 : index
    %5 = vector.load %arg2[%c0, %c0_0, %c0_1] : memref<1x4x256xf32, #tpu.memory_space<vmem>>, vector<1x4x256xf32>
    %6 = vector.shape_cast %5 : vector<1x4x256xf32> to vector<4x256xf32>
    %c0_2 = arith.constant 0 : index
    %c0_3 = arith.constant 0 : index
    %7 = vector.load %arg3[%c0_2, %c0_3] : memref<4x36xf32, #tpu.memory_space<vmem>>, vector<4x36xf32>
    %c17_i32 = arith.constant 17 : i32
    %8 = tpu.dynamic_rotate %6 by %c17_i32 dim 1 : vector<4x256xf32>, i32 -> vector<4x256xf32>
    %c1_i32 = arith.constant 1 : i32
    %9 = vector.broadcast %c1_i32 : i32 to vector<1x256xi32>
    %10 = arith.cmpi sge, %4, %9 : vector<1x256xi32>
    %c17_i32_4 = arith.constant 17 : i32
    %11 = vector.broadcast %c17_i32_4 : i32 to vector<1x256xi32>
    %12 = arith.cmpi slt, %4, %11 : vector<1x256xi32>
    %13 = arith.andi %10, %12 : vector<1x256xi1>
    %c1_i32_5 = arith.constant 1 : i32
    %14 = vector.broadcast %c1_i32_5 : i32 to vector<1x256xi32>
    %15 = arith.cmpi sge, %2, %14 : vector<1x256xi32>
    %16 = arith.andi %13, %15 : vector<1x256xi1>
    %c17_i32_6 = arith.constant 17 : i32
    %17 = vector.broadcast %c17_i32_6 : i32 to vector<1x256xi32>
    %18 = arith.cmpi slt, %2, %17 : vector<1x256xi32>
    %19 = arith.andi %16, %18 : vector<1x256xi1>
    %cst = arith.constant 0.000000e+00 : f32
    %20 = vector.shape_cast %19 : vector<1x256xi1> to vector<1x256xi1>
    %21 = vector.broadcast %20 : vector<1x256xi1> to vector<4x256xi1>
    %22 = vector.broadcast %cst : f32 to vector<4x256xf32>
    %23 = arith.select %21, %8, %22 : vector<4x256xi1>, vector<4x256xf32>
    %c16_i32 = arith.constant 16 : i32
    %24 = tpu.dynamic_rotate %6 by %c16_i32 dim 1 : vector<4x256xf32>, i32 -> vector<4x256xf32>
    %c1_i32_7 = arith.constant 1 : i32
    %25 = vector.broadcast %c1_i32_7 : i32 to vector<1x256xi32>
    %26 = arith.cmpi sge, %4, %25 : vector<1x256xi32>
    %c17_i32_8 = arith.constant 17 : i32
    %27 = vector.broadcast %c17_i32_8 : i32 to vector<1x256xi32>
    %28 = arith.cmpi slt, %4, %27 : vector<1x256xi32>
    %29 = arith.andi %26, %28 : vector<1x256xi1>
    %c0_i32 = arith.constant 0 : i32
    %30 = vector.broadcast %c0_i32 : i32 to vector<1x256xi32>
    %31 = arith.cmpi sge, %2, %30 : vector<1x256xi32>
    %32 = arith.andi %29, %31 : vector<1x256xi1>
    %c16_i32_9 = arith.constant 16 : i32
    %33 = vector.broadcast %c16_i32_9 : i32 to vector<1x256xi32>
    %34 = arith.cmpi slt, %2, %33 : vector<1x256xi32>
    %35 = arith.andi %32, %34 : vector<1x256xi1>
    %cst_10 = arith.constant 0.000000e+00 : f32
    %36 = vector.shape_cast %35 : vector<1x256xi1> to vector<1x256xi1>
    %37 = vector.broadcast %36 : vector<1x256xi1> to vector<4x256xi1>
    %38 = vector.broadcast %cst_10 : f32 to vector<4x256xf32>
    %39 = arith.select %37, %24, %38 : vector<4x256xi1>, vector<4x256xf32>
    %c15_i32_11 = arith.constant 15 : i32
    %40 = tpu.dynamic_rotate %6 by %c15_i32_11 dim 1 : vector<4x256xf32>, i32 -> vector<4x256xf32>
    %c1_i32_12 = arith.constant 1 : i32
    %41 = vector.broadcast %c1_i32_12 : i32 to vector<1x256xi32>
    %42 = arith.cmpi sge, %4, %41 : vector<1x256xi32>
    %c17_i32_13 = arith.constant 17 : i32
    %43 = vector.broadcast %c17_i32_13 : i32 to vector<1x256xi32>
    %44 = arith.cmpi slt, %4, %43 : vector<1x256xi32>
    %45 = arith.andi %42, %44 : vector<1x256xi1>
    %c-1_i32 = arith.constant -1 : i32
    %46 = vector.broadcast %c-1_i32 : i32 to vector<1x256xi32>
    %47 = arith.cmpi sge, %2, %46 : vector<1x256xi32>
    %48 = arith.andi %45, %47 : vector<1x256xi1>
    %c15_i32_14 = arith.constant 15 : i32
    %49 = vector.broadcast %c15_i32_14 : i32 to vector<1x256xi32>
    %50 = arith.cmpi slt, %2, %49 : vector<1x256xi32>
    %51 = arith.andi %48, %50 : vector<1x256xi1>
    %cst_15 = arith.constant 0.000000e+00 : f32
    %52 = vector.shape_cast %51 : vector<1x256xi1> to vector<1x256xi1>
    %53 = vector.broadcast %52 : vector<1x256xi1> to vector<4x256xi1>
    %54 = vector.broadcast %cst_15 : f32 to vector<4x256xf32>
    %55 = arith.select %53, %40, %54 : vector<4x256xi1>, vector<4x256xf32>
    %c1_i32_16 = arith.constant 1 : i32
    %56 = tpu.dynamic_rotate %6 by %c1_i32_16 dim 1 : vector<4x256xf32>, i32 -> vector<4x256xf32>
    %c0_i32_17 = arith.constant 0 : i32
    %57 = vector.broadcast %c0_i32_17 : i32 to vector<1x256xi32>
    %58 = arith.cmpi sge, %4, %57 : vector<1x256xi32>
    %c16_i32_18 = arith.constant 16 : i32
    %59 = vector.broadcast %c16_i32_18 : i32 to vector<1x256xi32>
    %60 = arith.cmpi slt, %4, %59 : vector<1x256xi32>
    %61 = arith.andi %58, %60 : vector<1x256xi1>
    %c1_i32_19 = arith.constant 1 : i32
    %62 = vector.broadcast %c1_i32_19 : i32 to vector<1x256xi32>
    %63 = arith.cmpi sge, %2, %62 : vector<1x256xi32>
    %64 = arith.andi %61, %63 : vector<1x256xi1>
    %c17_i32_20 = arith.constant 17 : i32
    %65 = vector.broadcast %c17_i32_20 : i32 to vector<1x256xi32>
    %66 = arith.cmpi slt, %2, %65 : vector<1x256xi32>
    %67 = arith.andi %64, %66 : vector<1x256xi1>
    %cst_21 = arith.constant 0.000000e+00 : f32
    %68 = vector.shape_cast %67 : vector<1x256xi1> to vector<1x256xi1>
    %69 = vector.broadcast %68 : vector<1x256xi1> to vector<4x256xi1>
    %70 = vector.broadcast %cst_21 : f32 to vector<4x256xf32>
    %71 = arith.select %69, %56, %70 : vector<4x256xi1>, vector<4x256xf32>
    %c255_i32 = arith.constant 255 : i32
    %72 = tpu.dynamic_rotate %6 by %c255_i32 dim 1 : vector<4x256xf32>, i32 -> vector<4x256xf32>
    %c0_i32_22 = arith.constant 0 : i32
    %73 = vector.broadcast %c0_i32_22 : i32 to vector<1x256xi32>
    %74 = arith.cmpi sge, %4, %73 : vector<1x256xi32>
    %c16_i32_23 = arith.constant 16 : i32
    %75 = vector.broadcast %c16_i32_23 : i32 to vector<1x256xi32>
    %76 = arith.cmpi slt, %4, %75 : vector<1x256xi32>
    %77 = arith.andi %74, %76 : vector<1x256xi1>
    %c-1_i32_24 = arith.constant -1 : i32
    %78 = vector.broadcast %c-1_i32_24 : i32 to vector<1x256xi32>
    %79 = arith.cmpi sge, %2, %78 : vector<1x256xi32>
    %80 = arith.andi %77, %79 : vector<1x256xi1>
    %c15_i32_25 = arith.constant 15 : i32
    %81 = vector.broadcast %c15_i32_25 : i32 to vector<1x256xi32>
    %82 = arith.cmpi slt, %2, %81 : vector<1x256xi32>
    %83 = arith.andi %80, %82 : vector<1x256xi1>
    %cst_26 = arith.constant 0.000000e+00 : f32
    %84 = vector.shape_cast %83 : vector<1x256xi1> to vector<1x256xi1>
    %85 = vector.broadcast %84 : vector<1x256xi1> to vector<4x256xi1>
    %86 = vector.broadcast %cst_26 : f32 to vector<4x256xf32>
    %87 = arith.select %85, %72, %86 : vector<4x256xi1>, vector<4x256xf32>
    %c241_i32 = arith.constant 241 : i32
    %88 = tpu.dynamic_rotate %6 by %c241_i32 dim 1 : vector<4x256xf32>, i32 -> vector<4x256xf32>
    %c-1_i32_27 = arith.constant -1 : i32
    %89 = vector.broadcast %c-1_i32_27 : i32 to vector<1x256xi32>
    %90 = arith.cmpi sge, %4, %89 : vector<1x256xi32>
    %c15_i32_28 = arith.constant 15 : i32
    %91 = vector.broadcast %c15_i32_28 : i32 to vector<1x256xi32>
    %92 = arith.cmpi slt, %4, %91 : vector<1x256xi32>
    %93 = arith.andi %90, %92 : vector<1x256xi1>
    %c1_i32_29 = arith.constant 1 : i32
    %94 = vector.broadcast %c1_i32_29 : i32 to vector<1x256xi32>
    %95 = arith.cmpi sge, %2, %94 : vector<1x256xi32>
    %96 = arith.andi %93, %95 : vector<1x256xi1>
    %c17_i32_30 = arith.constant 17 : i32
    %97 = vector.broadcast %c17_i32_30 : i32 to vector<1x256xi32>
    %98 = arith.cmpi slt, %2, %97 : vector<1x256xi32>
    %99 = arith.andi %96, %98 : vector<1x256xi1>
    %cst_31 = arith.constant 0.000000e+00 : f32
    %100 = vector.shape_cast %99 : vector<1x256xi1> to vector<1x256xi1>
    %101 = vector.broadcast %100 : vector<1x256xi1> to vector<4x256xi1>
    %102 = vector.broadcast %cst_31 : f32 to vector<4x256xf32>
    %103 = arith.select %101, %88, %102 : vector<4x256xi1>, vector<4x256xf32>
    %c240_i32 = arith.constant 240 : i32
    %104 = tpu.dynamic_rotate %6 by %c240_i32 dim 1 : vector<4x256xf32>, i32 -> vector<4x256xf32>
    %c-1_i32_32 = arith.constant -1 : i32
    %105 = vector.broadcast %c-1_i32_32 : i32 to vector<1x256xi32>
    %106 = arith.cmpi sge, %4, %105 : vector<1x256xi32>
    %c15_i32_33 = arith.constant 15 : i32
    %107 = vector.broadcast %c15_i32_33 : i32 to vector<1x256xi32>
    %108 = arith.cmpi slt, %4, %107 : vector<1x256xi32>
    %109 = arith.andi %106, %108 : vector<1x256xi1>
    %c0_i32_34 = arith.constant 0 : i32
    %110 = vector.broadcast %c0_i32_34 : i32 to vector<1x256xi32>
    %111 = arith.cmpi sge, %2, %110 : vector<1x256xi32>
    %112 = arith.andi %109, %111 : vector<1x256xi1>
    %c16_i32_35 = arith.constant 16 : i32
    %113 = vector.broadcast %c16_i32_35 : i32 to vector<1x256xi32>
    %114 = arith.cmpi slt, %2, %113 : vector<1x256xi32>
    %115 = arith.andi %112, %114 : vector<1x256xi1>
    %cst_36 = arith.constant 0.000000e+00 : f32
    %116 = vector.shape_cast %115 : vector<1x256xi1> to vector<1x256xi1>
    %117 = vector.broadcast %116 : vector<1x256xi1> to vector<4x256xi1>
    %118 = vector.broadcast %cst_36 : f32 to vector<4x256xf32>
    %119 = arith.select %117, %104, %118 : vector<4x256xi1>, vector<4x256xf32>
    %c239_i32 = arith.constant 239 : i32
    %120 = tpu.dynamic_rotate %6 by %c239_i32 dim 1 : vector<4x256xf32>, i32 -> vector<4x256xf32>
    %c-1_i32_37 = arith.constant -1 : i32
    %121 = vector.broadcast %c-1_i32_37 : i32 to vector<1x256xi32>
    %122 = arith.cmpi sge, %4, %121 : vector<1x256xi32>
    %c15_i32_38 = arith.constant 15 : i32
    %123 = vector.broadcast %c15_i32_38 : i32 to vector<1x256xi32>
    %124 = arith.cmpi slt, %4, %123 : vector<1x256xi32>
    %125 = arith.andi %122, %124 : vector<1x256xi1>
    %c-1_i32_39 = arith.constant -1 : i32
    %126 = vector.broadcast %c-1_i32_39 : i32 to vector<1x256xi32>
    %127 = arith.cmpi sge, %2, %126 : vector<1x256xi32>
    %128 = arith.andi %125, %127 : vector<1x256xi1>
    %c15_i32_40 = arith.constant 15 : i32
    %129 = vector.broadcast %c15_i32_40 : i32 to vector<1x256xi32>
    %130 = arith.cmpi slt, %2, %129 : vector<1x256xi32>
    %131 = arith.andi %128, %130 : vector<1x256xi1>
    %cst_41 = arith.constant 0.000000e+00 : f32
    %132 = vector.shape_cast %131 : vector<1x256xi1> to vector<1x256xi1>
    %133 = vector.broadcast %132 : vector<1x256xi1> to vector<4x256xi1>
    %134 = vector.broadcast %cst_41 : f32 to vector<4x256xf32>
    %135 = arith.select %133, %120, %134 : vector<4x256xi1>, vector<4x256xf32>
    %136 = tpu.concatenate %23, %39, %55, %71, %6, %87, %103, %119, %135 in 0 : vector<4x256xf32>, vector<4x256xf32>, vector<4x256xf32>, vector<4x256xf32>, vector<4x256xf32>, vector<4x256xf32>, vector<4x256xf32>, vector<4x256xf32>, vector<4x256xf32> -> vector<36x256xf32>
    %cst_42 = arith.constant dense<0.000000e+00> : vector<4x256xf32>
    %137 = tpu.matmul %7, %136, %cst_42 {dimension_numbers = #tpu.dot_dimension_numbers<[1], [0], [0], [1], [0, 0, 1, 1], [], []>} : vector<4x36xf32>, vector<36x256xf32>, vector<4x256xf32> -> vector<4x256xf32>
    %c0_43 = arith.constant 0 : index
    %c0_44 = arith.constant 0 : index
    %138 = vector.load %arg4[%c0_43, %c0_44] : memref<4x1xf32, #tpu.memory_space<vmem>>, vector<4x1xf32>
    %139 = vector.broadcast %138 : vector<4x1xf32> to vector<4x256xf32>
    %140 = arith.addf %137, %139 : vector<4x256xf32>
    %c0_45 = arith.constant 0 : index
    %141 = memref.load %arg1[%c0_45] : memref<2xf32, #tpu.memory_space<smem>>
    %cst_46 = arith.constant 0.000000e+00 : f32
    %142 = vector.broadcast %cst_46 : f32 to vector<4x256xf32>
    %143 = arith.cmpf oge, %140, %142 : vector<4x256xf32>
    %144 = vector.broadcast %141 : f32 to vector<4x256xf32>
    %145 = arith.mulf %144, %140 : vector<4x256xf32>
    %146 = arith.select %143, %140, %145 : vector<4x256xi1>, vector<4x256xf32>
    %c0_47 = arith.constant 0 : index
    %c0_48 = arith.constant 0 : index
    %147 = vector.load %arg5[%c0_47, %c0_48] : memref<4x36xf32, #tpu.memory_space<vmem>>, vector<4x36xf32>
    %c17_i32_49 = arith.constant 17 : i32
    %148 = tpu.dynamic_rotate %146 by %c17_i32_49 dim 1 : vector<4x256xf32>, i32 -> vector<4x256xf32>
    %c1_i32_50 = arith.constant 1 : i32
    %149 = vector.broadcast %c1_i32_50 : i32 to vector<1x256xi32>
    %150 = arith.cmpi sge, %4, %149 : vector<1x256xi32>
    %c17_i32_51 = arith.constant 17 : i32
    %151 = vector.broadcast %c17_i32_51 : i32 to vector<1x256xi32>
    %152 = arith.cmpi slt, %4, %151 : vector<1x256xi32>
    %153 = arith.andi %150, %152 : vector<1x256xi1>
    %c1_i32_52 = arith.constant 1 : i32
    %154 = vector.broadcast %c1_i32_52 : i32 to vector<1x256xi32>
    %155 = arith.cmpi sge, %2, %154 : vector<1x256xi32>
    %156 = arith.andi %153, %155 : vector<1x256xi1>
    %c17_i32_53 = arith.constant 17 : i32
    %157 = vector.broadcast %c17_i32_53 : i32 to vector<1x256xi32>
    %158 = arith.cmpi slt, %2, %157 : vector<1x256xi32>
    %159 = arith.andi %156, %158 : vector<1x256xi1>
    %cst_54 = arith.constant 0.000000e+00 : f32
    %160 = vector.shape_cast %159 : vector<1x256xi1> to vector<1x256xi1>
    %161 = vector.broadcast %160 : vector<1x256xi1> to vector<4x256xi1>
    %162 = vector.broadcast %cst_54 : f32 to vector<4x256xf32>
    %163 = arith.select %161, %148, %162 : vector<4x256xi1>, vector<4x256xf32>
    %c16_i32_55 = arith.constant 16 : i32
    %164 = tpu.dynamic_rotate %146 by %c16_i32_55 dim 1 : vector<4x256xf32>, i32 -> vector<4x256xf32>
    %c1_i32_56 = arith.constant 1 : i32
    %165 = vector.broadcast %c1_i32_56 : i32 to vector<1x256xi32>
    %166 = arith.cmpi sge, %4, %165 : vector<1x256xi32>
    %c17_i32_57 = arith.constant 17 : i32
    %167 = vector.broadcast %c17_i32_57 : i32 to vector<1x256xi32>
    %168 = arith.cmpi slt, %4, %167 : vector<1x256xi32>
    %169 = arith.andi %166, %168 : vector<1x256xi1>
    %c0_i32_58 = arith.constant 0 : i32
    %170 = vector.broadcast %c0_i32_58 : i32 to vector<1x256xi32>
    %171 = arith.cmpi sge, %2, %170 : vector<1x256xi32>
    %172 = arith.andi %169, %171 : vector<1x256xi1>
    %c16_i32_59 = arith.constant 16 : i32
    %173 = vector.broadcast %c16_i32_59 : i32 to vector<1x256xi32>
    %174 = arith.cmpi slt, %2, %173 : vector<1x256xi32>
    %175 = arith.andi %172, %174 : vector<1x256xi1>
    %cst_60 = arith.constant 0.000000e+00 : f32
    %176 = vector.shape_cast %175 : vector<1x256xi1> to vector<1x256xi1>
    %177 = vector.broadcast %176 : vector<1x256xi1> to vector<4x256xi1>
    %178 = vector.broadcast %cst_60 : f32 to vector<4x256xf32>
    %179 = arith.select %177, %164, %178 : vector<4x256xi1>, vector<4x256xf32>
    %c15_i32_61 = arith.constant 15 : i32
    %180 = tpu.dynamic_rotate %146 by %c15_i32_61 dim 1 : vector<4x256xf32>, i32 -> vector<4x256xf32>
    %c1_i32_62 = arith.constant 1 : i32
    %181 = vector.broadcast %c1_i32_62 : i32 to vector<1x256xi32>
    %182 = arith.cmpi sge, %4, %181 : vector<1x256xi32>
    %c17_i32_63 = arith.constant 17 : i32
    %183 = vector.broadcast %c17_i32_63 : i32 to vector<1x256xi32>
    %184 = arith.cmpi slt, %4, %183 : vector<1x256xi32>
    %185 = arith.andi %182, %184 : vector<1x256xi1>
    %c-1_i32_64 = arith.constant -1 : i32
    %186 = vector.broadcast %c-1_i32_64 : i32 to vector<1x256xi32>
    %187 = arith.cmpi sge, %2, %186 : vector<1x256xi32>
    %188 = arith.andi %185, %187 : vector<1x256xi1>
    %c15_i32_65 = arith.constant 15 : i32
    %189 = vector.broadcast %c15_i32_65 : i32 to vector<1x256xi32>
    %190 = arith.cmpi slt, %2, %189 : vector<1x256xi32>
    %191 = arith.andi %188, %190 : vector<1x256xi1>
    %cst_66 = arith.constant 0.000000e+00 : f32
    %192 = vector.shape_cast %191 : vector<1x256xi1> to vector<1x256xi1>
    %193 = vector.broadcast %192 : vector<1x256xi1> to vector<4x256xi1>
    %194 = vector.broadcast %cst_66 : f32 to vector<4x256xf32>
    %195 = arith.select %193, %180, %194 : vector<4x256xi1>, vector<4x256xf32>
    %c1_i32_67 = arith.constant 1 : i32
    %196 = tpu.dynamic_rotate %146 by %c1_i32_67 dim 1 : vector<4x256xf32>, i32 -> vector<4x256xf32>
    %c0_i32_68 = arith.constant 0 : i32
    %197 = vector.broadcast %c0_i32_68 : i32 to vector<1x256xi32>
    %198 = arith.cmpi sge, %4, %197 : vector<1x256xi32>
    %c16_i32_69 = arith.constant 16 : i32
    %199 = vector.broadcast %c16_i32_69 : i32 to vector<1x256xi32>
    %200 = arith.cmpi slt, %4, %199 : vector<1x256xi32>
    %201 = arith.andi %198, %200 : vector<1x256xi1>
    %c1_i32_70 = arith.constant 1 : i32
    %202 = vector.broadcast %c1_i32_70 : i32 to vector<1x256xi32>
    %203 = arith.cmpi sge, %2, %202 : vector<1x256xi32>
    %204 = arith.andi %201, %203 : vector<1x256xi1>
    %c17_i32_71 = arith.constant 17 : i32
    %205 = vector.broadcast %c17_i32_71 : i32 to vector<1x256xi32>
    %206 = arith.cmpi slt, %2, %205 : vector<1x256xi32>
    %207 = arith.andi %204, %206 : vector<1x256xi1>
    %cst_72 = arith.constant 0.000000e+00 : f32
    %208 = vector.shape_cast %207 : vector<1x256xi1> to vector<1x256xi1>
    %209 = vector.broadcast %208 : vector<1x256xi1> to vector<4x256xi1>
    %210 = vector.broadcast %cst_72 : f32 to vector<4x256xf32>
    %211 = arith.select %209, %196, %210 : vector<4x256xi1>, vector<4x256xf32>
    %c255_i32_73 = arith.constant 255 : i32
    %212 = tpu.dynamic_rotate %146 by %c255_i32_73 dim 1 : vector<4x256xf32>, i32 -> vector<4x256xf32>
    %c0_i32_74 = arith.constant 0 : i32
    %213 = vector.broadcast %c0_i32_74 : i32 to vector<1x256xi32>
    %214 = arith.cmpi sge, %4, %213 : vector<1x256xi32>
    %c16_i32_75 = arith.constant 16 : i32
    %215 = vector.broadcast %c16_i32_75 : i32 to vector<1x256xi32>
    %216 = arith.cmpi slt, %4, %215 : vector<1x256xi32>
    %217 = arith.andi %214, %216 : vector<1x256xi1>
    %c-1_i32_76 = arith.constant -1 : i32
    %218 = vector.broadcast %c-1_i32_76 : i32 to vector<1x256xi32>
    %219 = arith.cmpi sge, %2, %218 : vector<1x256xi32>
    %220 = arith.andi %217, %219 : vector<1x256xi1>
    %c15_i32_77 = arith.constant 15 : i32
    %221 = vector.broadcast %c15_i32_77 : i32 to vector<1x256xi32>
    %222 = arith.cmpi slt, %2, %221 : vector<1x256xi32>
    %223 = arith.andi %220, %222 : vector<1x256xi1>
    %cst_78 = arith.constant 0.000000e+00 : f32
    %224 = vector.shape_cast %223 : vector<1x256xi1> to vector<1x256xi1>
    %225 = vector.broadcast %224 : vector<1x256xi1> to vector<4x256xi1>
    %226 = vector.broadcast %cst_78 : f32 to vector<4x256xf32>
    %227 = arith.select %225, %212, %226 : vector<4x256xi1>, vector<4x256xf32>
    %c241_i32_79 = arith.constant 241 : i32
    %228 = tpu.dynamic_rotate %146 by %c241_i32_79 dim 1 : vector<4x256xf32>, i32 -> vector<4x256xf32>
    %c-1_i32_80 = arith.constant -1 : i32
    %229 = vector.broadcast %c-1_i32_80 : i32 to vector<1x256xi32>
    %230 = arith.cmpi sge, %4, %229 : vector<1x256xi32>
    %c15_i32_81 = arith.constant 15 : i32
    %231 = vector.broadcast %c15_i32_81 : i32 to vector<1x256xi32>
    %232 = arith.cmpi slt, %4, %231 : vector<1x256xi32>
    %233 = arith.andi %230, %232 : vector<1x256xi1>
    %c1_i32_82 = arith.constant 1 : i32
    %234 = vector.broadcast %c1_i32_82 : i32 to vector<1x256xi32>
    %235 = arith.cmpi sge, %2, %234 : vector<1x256xi32>
    %236 = arith.andi %233, %235 : vector<1x256xi1>
    %c17_i32_83 = arith.constant 17 : i32
    %237 = vector.broadcast %c17_i32_83 : i32 to vector<1x256xi32>
    %238 = arith.cmpi slt, %2, %237 : vector<1x256xi32>
    %239 = arith.andi %236, %238 : vector<1x256xi1>
    %cst_84 = arith.constant 0.000000e+00 : f32
    %240 = vector.shape_cast %239 : vector<1x256xi1> to vector<1x256xi1>
    %241 = vector.broadcast %240 : vector<1x256xi1> to vector<4x256xi1>
    %242 = vector.broadcast %cst_84 : f32 to vector<4x256xf32>
    %243 = arith.select %241, %228, %242 : vector<4x256xi1>, vector<4x256xf32>
    %c240_i32_85 = arith.constant 240 : i32
    %244 = tpu.dynamic_rotate %146 by %c240_i32_85 dim 1 : vector<4x256xf32>, i32 -> vector<4x256xf32>
    %c-1_i32_86 = arith.constant -1 : i32
    %245 = vector.broadcast %c-1_i32_86 : i32 to vector<1x256xi32>
    %246 = arith.cmpi sge, %4, %245 : vector<1x256xi32>
    %c15_i32_87 = arith.constant 15 : i32
    %247 = vector.broadcast %c15_i32_87 : i32 to vector<1x256xi32>
    %248 = arith.cmpi slt, %4, %247 : vector<1x256xi32>
    %249 = arith.andi %246, %248 : vector<1x256xi1>
    %c0_i32_88 = arith.constant 0 : i32
    %250 = vector.broadcast %c0_i32_88 : i32 to vector<1x256xi32>
    %251 = arith.cmpi sge, %2, %250 : vector<1x256xi32>
    %252 = arith.andi %249, %251 : vector<1x256xi1>
    %c16_i32_89 = arith.constant 16 : i32
    %253 = vector.broadcast %c16_i32_89 : i32 to vector<1x256xi32>
    %254 = arith.cmpi slt, %2, %253 : vector<1x256xi32>
    %255 = arith.andi %252, %254 : vector<1x256xi1>
    %cst_90 = arith.constant 0.000000e+00 : f32
    %256 = vector.shape_cast %255 : vector<1x256xi1> to vector<1x256xi1>
    %257 = vector.broadcast %256 : vector<1x256xi1> to vector<4x256xi1>
    %258 = vector.broadcast %cst_90 : f32 to vector<4x256xf32>
    %259 = arith.select %257, %244, %258 : vector<4x256xi1>, vector<4x256xf32>
    %c239_i32_91 = arith.constant 239 : i32
    %260 = tpu.dynamic_rotate %146 by %c239_i32_91 dim 1 : vector<4x256xf32>, i32 -> vector<4x256xf32>
    %c-1_i32_92 = arith.constant -1 : i32
    %261 = vector.broadcast %c-1_i32_92 : i32 to vector<1x256xi32>
    %262 = arith.cmpi sge, %4, %261 : vector<1x256xi32>
    %c15_i32_93 = arith.constant 15 : i32
    %263 = vector.broadcast %c15_i32_93 : i32 to vector<1x256xi32>
    %264 = arith.cmpi slt, %4, %263 : vector<1x256xi32>
    %265 = arith.andi %262, %264 : vector<1x256xi1>
    %c-1_i32_94 = arith.constant -1 : i32
    %266 = vector.broadcast %c-1_i32_94 : i32 to vector<1x256xi32>
    %267 = arith.cmpi sge, %2, %266 : vector<1x256xi32>
    %268 = arith.andi %265, %267 : vector<1x256xi1>
    %c15_i32_95 = arith.constant 15 : i32
    %269 = vector.broadcast %c15_i32_95 : i32 to vector<1x256xi32>
    %270 = arith.cmpi slt, %2, %269 : vector<1x256xi32>
    %271 = arith.andi %268, %270 : vector<1x256xi1>
    %cst_96 = arith.constant 0.000000e+00 : f32
    %272 = vector.shape_cast %271 : vector<1x256xi1> to vector<1x256xi1>
    %273 = vector.broadcast %272 : vector<1x256xi1> to vector<4x256xi1>
    %274 = vector.broadcast %cst_96 : f32 to vector<4x256xf32>
    %275 = arith.select %273, %260, %274 : vector<4x256xi1>, vector<4x256xf32>
    %276 = tpu.concatenate %163, %179, %195, %211, %146, %227, %243, %259, %275 in 0 : vector<4x256xf32>, vector<4x256xf32>, vector<4x256xf32>, vector<4x256xf32>, vector<4x256xf32>, vector<4x256xf32>, vector<4x256xf32>, vector<4x256xf32>, vector<4x256xf32> -> vector<36x256xf32>
    %cst_97 = arith.constant dense<0.000000e+00> : vector<4x256xf32>
    %277 = tpu.matmul %147, %276, %cst_97 {dimension_numbers = #tpu.dot_dimension_numbers<[1], [0], [0], [1], [0, 0, 1, 1], [], []>} : vector<4x36xf32>, vector<36x256xf32>, vector<4x256xf32> -> vector<4x256xf32>
    %c0_98 = arith.constant 0 : index
    %c0_99 = arith.constant 0 : index
    %278 = vector.load %arg6[%c0_98, %c0_99] : memref<4x1xf32, #tpu.memory_space<vmem>>, vector<4x1xf32>
    %279 = vector.broadcast %278 : vector<4x1xf32> to vector<4x256xf32>
    %280 = arith.addf %277, %279 : vector<4x256xf32>
    %c1 = arith.constant 1 : index
    %281 = memref.load %arg1[%c1] : memref<2xf32, #tpu.memory_space<smem>>
    %cst_100 = arith.constant 0.000000e+00 : f32
    %282 = vector.broadcast %cst_100 : f32 to vector<4x256xf32>
    %283 = arith.cmpf oge, %280, %282 : vector<4x256xf32>
    %284 = vector.broadcast %281 : f32 to vector<4x256xf32>
    %285 = arith.mulf %284, %280 : vector<4x256xf32>
    %286 = arith.select %283, %280, %285 : vector<4x256xi1>, vector<4x256xf32>
    %c0_101 = arith.constant 0 : index
    %c0_102 = arith.constant 0 : index
    %287 = vector.load %arg7[%c0_101, %c0_102] : memref<4x36xf32, #tpu.memory_space<vmem>>, vector<4x36xf32>
    %c17_i32_103 = arith.constant 17 : i32
    %288 = tpu.dynamic_rotate %286 by %c17_i32_103 dim 1 : vector<4x256xf32>, i32 -> vector<4x256xf32>
    %c1_i32_104 = arith.constant 1 : i32
    %289 = vector.broadcast %c1_i32_104 : i32 to vector<1x256xi32>
    %290 = arith.cmpi sge, %4, %289 : vector<1x256xi32>
    %c17_i32_105 = arith.constant 17 : i32
    %291 = vector.broadcast %c17_i32_105 : i32 to vector<1x256xi32>
    %292 = arith.cmpi slt, %4, %291 : vector<1x256xi32>
    %293 = arith.andi %290, %292 : vector<1x256xi1>
    %c1_i32_106 = arith.constant 1 : i32
    %294 = vector.broadcast %c1_i32_106 : i32 to vector<1x256xi32>
    %295 = arith.cmpi sge, %2, %294 : vector<1x256xi32>
    %296 = arith.andi %293, %295 : vector<1x256xi1>
    %c17_i32_107 = arith.constant 17 : i32
    %297 = vector.broadcast %c17_i32_107 : i32 to vector<1x256xi32>
    %298 = arith.cmpi slt, %2, %297 : vector<1x256xi32>
    %299 = arith.andi %296, %298 : vector<1x256xi1>
    %cst_108 = arith.constant 0.000000e+00 : f32
    %300 = vector.shape_cast %299 : vector<1x256xi1> to vector<1x256xi1>
    %301 = vector.broadcast %300 : vector<1x256xi1> to vector<4x256xi1>
    %302 = vector.broadcast %cst_108 : f32 to vector<4x256xf32>
    %303 = arith.select %301, %288, %302 : vector<4x256xi1>, vector<4x256xf32>
    %c16_i32_109 = arith.constant 16 : i32
    %304 = tpu.dynamic_rotate %286 by %c16_i32_109 dim 1 : vector<4x256xf32>, i32 -> vector<4x256xf32>
    %c1_i32_110 = arith.constant 1 : i32
    %305 = vector.broadcast %c1_i32_110 : i32 to vector<1x256xi32>
    %306 = arith.cmpi sge, %4, %305 : vector<1x256xi32>
    %c17_i32_111 = arith.constant 17 : i32
    %307 = vector.broadcast %c17_i32_111 : i32 to vector<1x256xi32>
    %308 = arith.cmpi slt, %4, %307 : vector<1x256xi32>
    %309 = arith.andi %306, %308 : vector<1x256xi1>
    %c0_i32_112 = arith.constant 0 : i32
    %310 = vector.broadcast %c0_i32_112 : i32 to vector<1x256xi32>
    %311 = arith.cmpi sge, %2, %310 : vector<1x256xi32>
    %312 = arith.andi %309, %311 : vector<1x256xi1>
    %c16_i32_113 = arith.constant 16 : i32
    %313 = vector.broadcast %c16_i32_113 : i32 to vector<1x256xi32>
    %314 = arith.cmpi slt, %2, %313 : vector<1x256xi32>
    %315 = arith.andi %312, %314 : vector<1x256xi1>
    %cst_114 = arith.constant 0.000000e+00 : f32
    %316 = vector.shape_cast %315 : vector<1x256xi1> to vector<1x256xi1>
    %317 = vector.broadcast %316 : vector<1x256xi1> to vector<4x256xi1>
    %318 = vector.broadcast %cst_114 : f32 to vector<4x256xf32>
    %319 = arith.select %317, %304, %318 : vector<4x256xi1>, vector<4x256xf32>
    %c15_i32_115 = arith.constant 15 : i32
    %320 = tpu.dynamic_rotate %286 by %c15_i32_115 dim 1 : vector<4x256xf32>, i32 -> vector<4x256xf32>
    %c1_i32_116 = arith.constant 1 : i32
    %321 = vector.broadcast %c1_i32_116 : i32 to vector<1x256xi32>
    %322 = arith.cmpi sge, %4, %321 : vector<1x256xi32>
    %c17_i32_117 = arith.constant 17 : i32
    %323 = vector.broadcast %c17_i32_117 : i32 to vector<1x256xi32>
    %324 = arith.cmpi slt, %4, %323 : vector<1x256xi32>
    %325 = arith.andi %322, %324 : vector<1x256xi1>
    %c-1_i32_118 = arith.constant -1 : i32
    %326 = vector.broadcast %c-1_i32_118 : i32 to vector<1x256xi32>
    %327 = arith.cmpi sge, %2, %326 : vector<1x256xi32>
    %328 = arith.andi %325, %327 : vector<1x256xi1>
    %c15_i32_119 = arith.constant 15 : i32
    %329 = vector.broadcast %c15_i32_119 : i32 to vector<1x256xi32>
    %330 = arith.cmpi slt, %2, %329 : vector<1x256xi32>
    %331 = arith.andi %328, %330 : vector<1x256xi1>
    %cst_120 = arith.constant 0.000000e+00 : f32
    %332 = vector.shape_cast %331 : vector<1x256xi1> to vector<1x256xi1>
    %333 = vector.broadcast %332 : vector<1x256xi1> to vector<4x256xi1>
    %334 = vector.broadcast %cst_120 : f32 to vector<4x256xf32>
    %335 = arith.select %333, %320, %334 : vector<4x256xi1>, vector<4x256xf32>
    %c1_i32_121 = arith.constant 1 : i32
    %336 = tpu.dynamic_rotate %286 by %c1_i32_121 dim 1 : vector<4x256xf32>, i32 -> vector<4x256xf32>
    %c0_i32_122 = arith.constant 0 : i32
    %337 = vector.broadcast %c0_i32_122 : i32 to vector<1x256xi32>
    %338 = arith.cmpi sge, %4, %337 : vector<1x256xi32>
    %c16_i32_123 = arith.constant 16 : i32
    %339 = vector.broadcast %c16_i32_123 : i32 to vector<1x256xi32>
    %340 = arith.cmpi slt, %4, %339 : vector<1x256xi32>
    %341 = arith.andi %338, %340 : vector<1x256xi1>
    %c1_i32_124 = arith.constant 1 : i32
    %342 = vector.broadcast %c1_i32_124 : i32 to vector<1x256xi32>
    %343 = arith.cmpi sge, %2, %342 : vector<1x256xi32>
    %344 = arith.andi %341, %343 : vector<1x256xi1>
    %c17_i32_125 = arith.constant 17 : i32
    %345 = vector.broadcast %c17_i32_125 : i32 to vector<1x256xi32>
    %346 = arith.cmpi slt, %2, %345 : vector<1x256xi32>
    %347 = arith.andi %344, %346 : vector<1x256xi1>
    %cst_126 = arith.constant 0.000000e+00 : f32
    %348 = vector.shape_cast %347 : vector<1x256xi1> to vector<1x256xi1>
    %349 = vector.broadcast %348 : vector<1x256xi1> to vector<4x256xi1>
    %350 = vector.broadcast %cst_126 : f32 to vector<4x256xf32>
    %351 = arith.select %349, %336, %350 : vector<4x256xi1>, vector<4x256xf32>
    %c255_i32_127 = arith.constant 255 : i32
    %352 = tpu.dynamic_rotate %286 by %c255_i32_127 dim 1 : vector<4x256xf32>, i32 -> vector<4x256xf32>
    %c0_i32_128 = arith.constant 0 : i32
    %353 = vector.broadcast %c0_i32_128 : i32 to vector<1x256xi32>
    %354 = arith.cmpi sge, %4, %353 : vector<1x256xi32>
    %c16_i32_129 = arith.constant 16 : i32
    %355 = vector.broadcast %c16_i32_129 : i32 to vector<1x256xi32>
    %356 = arith.cmpi slt, %4, %355 : vector<1x256xi32>
    %357 = arith.andi %354, %356 : vector<1x256xi1>
    %c-1_i32_130 = arith.constant -1 : i32
    %358 = vector.broadcast %c-1_i32_130 : i32 to vector<1x256xi32>
    %359 = arith.cmpi sge, %2, %358 : vector<1x256xi32>
    %360 = arith.andi %357, %359 : vector<1x256xi1>
    %c15_i32_131 = arith.constant 15 : i32
    %361 = vector.broadcast %c15_i32_131 : i32 to vector<1x256xi32>
    %362 = arith.cmpi slt, %2, %361 : vector<1x256xi32>
    %363 = arith.andi %360, %362 : vector<1x256xi1>
    %cst_132 = arith.constant 0.000000e+00 : f32
    %364 = vector.shape_cast %363 : vector<1x256xi1> to vector<1x256xi1>
    %365 = vector.broadcast %364 : vector<1x256xi1> to vector<4x256xi1>
    %366 = vector.broadcast %cst_132 : f32 to vector<4x256xf32>
    %367 = arith.select %365, %352, %366 : vector<4x256xi1>, vector<4x256xf32>
    %c241_i32_133 = arith.constant 241 : i32
    %368 = tpu.dynamic_rotate %286 by %c241_i32_133 dim 1 : vector<4x256xf32>, i32 -> vector<4x256xf32>
    %c-1_i32_134 = arith.constant -1 : i32
    %369 = vector.broadcast %c-1_i32_134 : i32 to vector<1x256xi32>
    %370 = arith.cmpi sge, %4, %369 : vector<1x256xi32>
    %c15_i32_135 = arith.constant 15 : i32
    %371 = vector.broadcast %c15_i32_135 : i32 to vector<1x256xi32>
    %372 = arith.cmpi slt, %4, %371 : vector<1x256xi32>
    %373 = arith.andi %370, %372 : vector<1x256xi1>
    %c1_i32_136 = arith.constant 1 : i32
    %374 = vector.broadcast %c1_i32_136 : i32 to vector<1x256xi32>
    %375 = arith.cmpi sge, %2, %374 : vector<1x256xi32>
    %376 = arith.andi %373, %375 : vector<1x256xi1>
    %c17_i32_137 = arith.constant 17 : i32
    %377 = vector.broadcast %c17_i32_137 : i32 to vector<1x256xi32>
    %378 = arith.cmpi slt, %2, %377 : vector<1x256xi32>
    %379 = arith.andi %376, %378 : vector<1x256xi1>
    %cst_138 = arith.constant 0.000000e+00 : f32
    %380 = vector.shape_cast %379 : vector<1x256xi1> to vector<1x256xi1>
    %381 = vector.broadcast %380 : vector<1x256xi1> to vector<4x256xi1>
    %382 = vector.broadcast %cst_138 : f32 to vector<4x256xf32>
    %383 = arith.select %381, %368, %382 : vector<4x256xi1>, vector<4x256xf32>
    %c240_i32_139 = arith.constant 240 : i32
    %384 = tpu.dynamic_rotate %286 by %c240_i32_139 dim 1 : vector<4x256xf32>, i32 -> vector<4x256xf32>
    %c-1_i32_140 = arith.constant -1 : i32
    %385 = vector.broadcast %c-1_i32_140 : i32 to vector<1x256xi32>
    %386 = arith.cmpi sge, %4, %385 : vector<1x256xi32>
    %c15_i32_141 = arith.constant 15 : i32
    %387 = vector.broadcast %c15_i32_141 : i32 to vector<1x256xi32>
    %388 = arith.cmpi slt, %4, %387 : vector<1x256xi32>
    %389 = arith.andi %386, %388 : vector<1x256xi1>
    %c0_i32_142 = arith.constant 0 : i32
    %390 = vector.broadcast %c0_i32_142 : i32 to vector<1x256xi32>
    %391 = arith.cmpi sge, %2, %390 : vector<1x256xi32>
    %392 = arith.andi %389, %391 : vector<1x256xi1>
    %c16_i32_143 = arith.constant 16 : i32
    %393 = vector.broadcast %c16_i32_143 : i32 to vector<1x256xi32>
    %394 = arith.cmpi slt, %2, %393 : vector<1x256xi32>
    %395 = arith.andi %392, %394 : vector<1x256xi1>
    %cst_144 = arith.constant 0.000000e+00 : f32
    %396 = vector.shape_cast %395 : vector<1x256xi1> to vector<1x256xi1>
    %397 = vector.broadcast %396 : vector<1x256xi1> to vector<4x256xi1>
    %398 = vector.broadcast %cst_144 : f32 to vector<4x256xf32>
    %399 = arith.select %397, %384, %398 : vector<4x256xi1>, vector<4x256xf32>
    %c239_i32_145 = arith.constant 239 : i32
    %400 = tpu.dynamic_rotate %286 by %c239_i32_145 dim 1 : vector<4x256xf32>, i32 -> vector<4x256xf32>
    %c-1_i32_146 = arith.constant -1 : i32
    %401 = vector.broadcast %c-1_i32_146 : i32 to vector<1x256xi32>
    %402 = arith.cmpi sge, %4, %401 : vector<1x256xi32>
    %c15_i32_147 = arith.constant 15 : i32
    %403 = vector.broadcast %c15_i32_147 : i32 to vector<1x256xi32>
    %404 = arith.cmpi slt, %4, %403 : vector<1x256xi32>
    %405 = arith.andi %402, %404 : vector<1x256xi1>
    %c-1_i32_148 = arith.constant -1 : i32
    %406 = vector.broadcast %c-1_i32_148 : i32 to vector<1x256xi32>
    %407 = arith.cmpi sge, %2, %406 : vector<1x256xi32>
    %408 = arith.andi %405, %407 : vector<1x256xi1>
    %c15_i32_149 = arith.constant 15 : i32
    %409 = vector.broadcast %c15_i32_149 : i32 to vector<1x256xi32>
    %410 = arith.cmpi slt, %2, %409 : vector<1x256xi32>
    %411 = arith.andi %408, %410 : vector<1x256xi1>
    %cst_150 = arith.constant 0.000000e+00 : f32
    %412 = vector.shape_cast %411 : vector<1x256xi1> to vector<1x256xi1>
    %413 = vector.broadcast %412 : vector<1x256xi1> to vector<4x256xi1>
    %414 = vector.broadcast %cst_150 : f32 to vector<4x256xf32>
    %415 = arith.select %413, %400, %414 : vector<4x256xi1>, vector<4x256xf32>
    %416 = tpu.concatenate %303, %319, %335, %351, %286, %367, %383, %399, %415 in 0 : vector<4x256xf32>, vector<4x256xf32>, vector<4x256xf32>, vector<4x256xf32>, vector<4x256xf32>, vector<4x256xf32>, vector<4x256xf32>, vector<4x256xf32>, vector<4x256xf32> -> vector<36x256xf32>
    %cst_151 = arith.constant dense<0.000000e+00> : vector<4x256xf32>
    %417 = tpu.matmul %287, %416, %cst_151 {dimension_numbers = #tpu.dot_dimension_numbers<[1], [0], [0], [1], [0, 0, 1, 1], [], []>} : vector<4x36xf32>, vector<36x256xf32>, vector<4x256xf32> -> vector<4x256xf32>
    %c0_152 = arith.constant 0 : index
    %c0_153 = arith.constant 0 : index
    %418 = vector.load %arg8[%c0_152, %c0_153] : memref<4x1xf32, #tpu.memory_space<vmem>>, vector<4x1xf32>
    %419 = vector.broadcast %418 : vector<4x1xf32> to vector<4x256xf32>
    %420 = arith.addf %417, %419 : vector<4x256xf32>
    %421 = arith.addf %420, %6 : vector<4x256xf32>
    %c0_154 = arith.constant 0 : index
    %c0_155 = arith.constant 0 : index
    %c0_156 = arith.constant 0 : index
    %422 = vector.load %arg9[%c0_154, %c0_155, %c0_156] : memref<1x4x256xf32, #tpu.memory_space<vmem>>, vector<1x4x256xf32>
    %423 = vector.shape_cast %422 : vector<1x4x256xf32> to vector<4x256xf32>
    %424 = vector.shape_cast %421 : vector<4x256xf32> to vector<1x4x256xf32>
    tpu.vector_store %arg9[%c0_154, %c0_155, %c0_156], %424 {strides = array<i32>} : memref<1x4x256xf32, #tpu.memory_space<vmem>>, vector<1x4x256xf32>,
    return
  }
  func.func @transform_0(%arg0: i32) -> i32 {
    %c0_i32 = arith.constant 0 : i32
    %c0_i32_0 = arith.constant 0 : i32
    return %c0_i32 : i32
  }
  func.func @transform_1(%arg0: i32) -> (i32, i32, i32) {
    %c0_i32 = arith.constant 0 : i32
    %c0_i32_0 = arith.constant 0 : i32
    %c0_i32_1 = arith.constant 0 : i32
    return %arg0, %c0_i32, %c0_i32_0 : i32, i32, i32
  }
  func.func @transform_2(%arg0: i32) -> (i32, i32) {
    %c0_i32 = arith.constant 0 : i32
    %c0_i32_0 = arith.constant 0 : i32
    %c0_i32_1 = arith.constant 0 : i32
    return %c0_i32, %c0_i32_0 : i32, i32
  }
  func.func @transform_3(%arg0: i32) -> (i32, i32) {
    %c0_i32 = arith.constant 0 : i32
    %c0_i32_0 = arith.constant 0 : i32
    %c0_i32_1 = arith.constant 0 : i32
    return %c0_i32, %c0_i32_0 : i32, i32
  }
  func.func @transform_4(%arg0: i32) -> (i32, i32) {
    %c0_i32 = arith.constant 0 : i32
    %c0_i32_0 = arith.constant 0 : i32
    %c0_i32_1 = arith.constant 0 : i32
    return %c0_i32, %c0_i32_0 : i32, i32
  }
  func.func @transform_5(%arg0: i32) -> (i32, i32) {
    %c0_i32 = arith.constant 0 : i32
    %c0_i32_0 = arith.constant 0 : i32
    %c0_i32_1 = arith.constant 0 : i32
    return %c0_i32, %c0_i32_0 : i32, i32
  }
  func.func @transform_6(%arg0: i32) -> (i32, i32) {
    %c0_i32 = arith.constant 0 : i32
    %c0_i32_0 = arith.constant 0 : i32
    %c0_i32_1 = arith.constant 0 : i32
    return %c0_i32, %c0_i32_0 : i32, i32
  }
  func.func @transform_7(%arg0: i32) -> (i32, i32) {
    %c0_i32 = arith.constant 0 : i32
    %c0_i32_0 = arith.constant 0 : i32
    %c0_i32_1 = arith.constant 0 : i32
    return %c0_i32, %c0_i32_0 : i32, i32
  }
  func.func @transform_8(%arg0: i32) -> (i32, i32, i32) {
    %c0_i32 = arith.constant 0 : i32
    %c0_i32_0 = arith.constant 0 : i32
    %c0_i32_1 = arith.constant 0 : i32
    return %arg0, %c0_i32, %c0_i32_0 : i32, i32, i32
  }
}

</mosaic_0001>

<llo_original>
// kernel: tpu_custom_call.1
$region0: #{tpu_custom_call.1}
  #allocation0 [shape = 'u32[]', space=smem, size = 0x4, offset = 0x4, fixed_abs, tag = 'smem constant byte address 0x4 - core index']
  #allocation1 [shape = 'u32[144,128]{1,0:T(1,128)}', space=vmem, size = 0x12000, scoped, tag = 'internal scratch']
  %s0 = inlined_call_operand.vmem [shape: f32[2], index: 0, kind: input, shape index: {}]
  %s1 = inlined_call_operand.vmem [shape: f32[2,4,256], index: 1, kind: input, shape index: {}]
  %s2 = inlined_call_operand.vmem [shape: f32[4,36], index: 2, kind: input, shape index: {}]
  %s3 = inlined_call_operand.vmem [shape: f32[4,1], index: 3, kind: input, shape index: {}]
  %s4 = inlined_call_operand.vmem [shape: f32[4,36], index: 4, kind: input, shape index: {}]
  %s5 = inlined_call_operand.vmem [shape: f32[4,1], index: 5, kind: input, shape index: {}]
  %s6 = inlined_call_operand.vmem [shape: f32[4,36], index: 6, kind: input, shape index: {}]
  %s7 = inlined_call_operand.vmem [shape: f32[4,1], index: 7, kind: input, shape index: {}]
  %s8 = inlined_call_operand.hbm [shape: f32[2,4,256], index: 8, kind: output, shape index: {}]
  %s9 = sld [smem:[#allocation0]]
  $region69: #{tpu_custom_call.1} parent=0
    _
  %s11 = ssub.s32 1, %s9
  %s12 = scalar_select 0, %s11, %s9
  $region1: #{tpu_custom_call.1} parent=0
    #allocation2 [shape = 'u8[512]{0}', space=smem, size = 0x200, scoped, tag = 'input window, operand 0, single buffered']
    #allocation3 [shape = 's32[2]{0}', space=sflag, size = 0x8, scoped, tag = 'scoped memory for tpu_custom_call.1']
    #allocation4 [shape = 's32[2]{0}', space=sflag, size = 0x8, scoped, tag = 'scoped memory for tpu_custom_call.1']
    #allocation5 [shape = 'u8[8192]{0}', space=vmem, size = 0x2000, scoped, tag = 'output window, operand 0']
    %13 = vsyncpa [#allocation4], 0
    %14 = vsyncpa [#allocation3], 0
    %s15 = scalar_lea.sflag [#allocation3], 1
    %16 = vsyncpa %s15, 0
    loop: start=0, step=1, limit=4
    $region2: #{tpu_custom_call.1} parent=1 // loop_pre_header
      _
    $region3: #{tpu_custom_call.1} parent=1 // loop_header
      %s18 = sphi 0, %s22
      %p19 = scmp.ge.s32.totalorder %s18, 4
      %s26 = sphi 0, %s26
      %s28 = sphi 0, %s26
      %s29 = sphi 0, %s28
      %s43 = sphi 0, %s29
      %s49 = sphi 0, %s51
      %s52 = sphi 0, %s49
      %s53 = sphi 0, %s52
      %s69 = sphi 0, %s53
      %s73 = sphi 0, %s73
      %s75 = sphi 0, %s73
      %s76 = sphi 0, %s75
      %s90 = sphi 0, %s76
      %s94 = sphi 0, %s94
      %s96 = sphi 0, %s94
      %s97 = sphi 0, %s96
      %s111 = sphi 0, %s97
      %s115 = sphi 0, %s115
      %s117 = sphi 0, %s115
      %s118 = sphi 0, %s117
      %s132 = sphi 0, %s118
      %s136 = sphi 0, %s136
      %s138 = sphi 0, %s136
      %s139 = sphi 0, %s138
      %s153 = sphi 0, %s139
      %s157 = sphi 0, %s157
      %s159 = sphi 0, %s157
      %s160 = sphi 0, %s159
      %s174 = sphi 0, %s160
      %s178 = sphi 0, %s178
      %s180 = sphi 0, %s178
      %s181 = sphi 0, %s180
      %s195 = sphi 0, %s181
      %s201 = sphi 0, %s203
      %s204 = sphi 0, %s201
      %s205 = sphi 0, %s204
      %s221 = sphi 0, %s205
    $region4: #{tpu_custom_call.1} parent=1 // loop_header_branch
      %21 = sbr.rel (%p19) target = $region8
    $region5: #{tpu_custom_call.1} parent=1 // loop_body
      %s23 = ssub.s32 %s18, 1
      %s24 = ssub.s32 %s18, 2
      %s25 = sadd.s32 %s18, 1
      %s27 = sadd.s32 %s26, 1
      %p30 = scmp.eq.s32.totalorder %s18, 1
      %p31 = scmp.ne.s32.totalorder %s26, %s28
      %p32 = scmp.eq.s32.totalorder %s18, 0
      %p33 = por %p31, %p32
      %p34 = scmp.ne.s32.totalorder %s26, %s28
      %p35 = scmp.eq.s32.totalorder %s23, 1
      %p36 = por %p34, %p35
      %p37 = scmp.ne.s32.totalorder %s28, %s29
      %p38 = scmp.eq.s32.totalorder %s23, 0
      %p39 = por %p37, %p38
      %p40 = scmp.ne.s32.totalorder %s28, %s29
      %p41 = scmp.eq.s32.totalorder %s24, 1
      %p42 = por %p40, %p41
      %p44 = scmp.ne.s32.totalorder %s29, %s43
      %p45 = scmp.eq.s32.totalorder %s24, 0
      %p46 = por %p44, %p45
      %s47 = ssub.s32 %s18, %s25
      %p48 = scmp.eq.s32.totalorder %s47, 0
      %s50 = sadd.s32 %s49, 1
      %s51 = scalar_select %p48, %s49, %s50
      %p54 = pneg %p48
      %p55 = scmp.eq.s32.totalorder %s18, 1
      %p56 = por %p54, %p55
      %p57 = scmp.ne.s32.totalorder %s49, %s52
      %p58 = scmp.eq.s32.totalorder %s18, 0
      %p59 = por %p57, %p58
      %p60 = scmp.ne.s32.totalorder %s49, %s52
      %p61 = scmp.eq.s32.totalorder %s23, 1
      %p62 = por %p60, %p61
      %p63 = scmp.ne.s32.totalorder %s52, %s53
      %p64 = scmp.eq.s32.totalorder %s23, 0
      %p65 = por %p63, %p64
      %p66 = scmp.ne.s32.totalorder %s52, %s53
      %p67 = scmp.eq.s32.totalorder %s24, 1
      %p68 = por %p66, %p67
      %p70 = scmp.ne.s32.totalorder %s53, %s69
      %p71 = scmp.eq.s32.totalorder %s24, 0
      %p72 = por %p70, %p71
      %s74 = sadd.s32 %s73, 1
      %p77 = scmp.eq.s32.totalorder %s18, 1
      %p78 = scmp.ne.s32.totalorder %s73, %s75
      %p79 = scmp.eq.s32.totalorder %s18, 0
      %p80 = por %p78, %p79
      %p81 = scmp.ne.s32.totalorder %s73, %s75
      %p82 = scmp.eq.s32.totalorder %s23, 1
      %p83 = por %p81, %p82
      %p84 = scmp.ne.s32.totalorder %s75, %s76
      %p85 = scmp.eq.s32.totalorder %s23, 0
      %p86 = por %p84, %p85
      %p87 = scmp.ne.s32.totalorder %s75, %s76
      %p88 = scmp.eq.s32.totalorder %s24, 1
      %p89 = por %p87, %p88
      %p91 = scmp.ne.s32.totalorder %s76, %s90
      %p92 = scmp.eq.s32.totalorder %s24, 0
      %p93 = por %p91, %p92
      %s95 = sadd.s32 %s94, 1
      %p98 = scmp.eq.s32.totalorder %s18, 1
      %p99 = scmp.ne.s32.totalorder %s94, %s96
      %p100 = scmp.eq.s32.totalorder %s18, 0
      %p101 = por %p99, %p100
      %p102 = scmp.ne.s32.totalorder %s94, %s96
      %p103 = scmp.eq.s32.totalorder %s23, 1
      %p104 = por %p102, %p103
      %p105 = scmp.ne.s32.totalorder %s96, %s97
      %p106 = scmp.eq.s32.totalorder %s23, 0
      %p107 = por %p105, %p106
      %p108 = scmp.ne.s32.totalorder %s96, %s97
      %p109 = scmp.eq.s32.totalorder %s24, 1
      %p110 = por %p108, %p109
      %p112 = scmp.ne.s32.totalorder %s97, %s111
      %p113 = scmp.eq.s32.totalorder %s24, 0
      %p114 = por %p112, %p113
      %s116 = sadd.s32 %s115, 1
      %p119 = scmp.eq.s32.totalorder %s18, 1
      %p120 = scmp.ne.s32.totalorder %s115, %s117
      %p121 = scmp.eq.s32.totalorder %s18, 0
      %p122 = por %p120, %p121
      %p123 = scmp.ne.s32.totalorder %s115, %s117
      %p124 = scmp.eq.s32.totalorder %s23, 1
      %p125 = por %p123, %p124
      %p126 = scmp.ne.s32.totalorder %s117, %s118
      %p127 = scmp.eq.s32.totalorder %s23, 0
      %p128 = por %p126, %p127
      %p129 = scmp.ne.s32.totalorder %s117, %s118
      %p130 = scmp.eq.s32.totalorder %s24, 1
      %p131 = por %p129, %p130
      %p133 = scmp.ne.s32.totalorder %s118, %s132
      %p134 = scmp.eq.s32.totalorder %s24, 0
      %p135 = por %p133, %p134
      %s137 = sadd.s32 %s136, 1
      %p140 = scmp.eq.s32.totalorder %s18, 1
      %p141 = scmp.ne.s32.totalorder %s136, %s138
      %p142 = scmp.eq.s32.totalorder %s18, 0
      %p143 = por %p141, %p142
      %p144 = scmp.ne.s32.totalorder %s136, %s138
      %p145 = scmp.eq.s32.totalorder %s23, 1
      %p146 = por %p144, %p145
      %p147 = scmp.ne.s32.totalorder %s138, %s139
      %p148 = scmp.eq.s32.totalorder %s23, 0
      %p149 = por %p147, %p148
      %p150 = scmp.ne.s32.totalorder %s138, %s139
      %p151 = scmp.eq.s32.totalorder %s24, 1
      %p152 = por %p150, %p151
      %p154 = scmp.ne.s32.totalorder %s139, %s153
      %p155 = scmp.eq.s32.totalorder %s24, 0
      %p156 = por %p154, %p155
      %s158 = sadd.s32 %s157, 1
      %p161 = scmp.eq.s32.totalorder %s18, 1
      %p162 = scmp.ne.s32.totalorder %s157, %s159
      %p163 = scmp.eq.s32.totalorder %s18, 0
      %p164 = por %p162, %p163
      %p165 = scmp.ne.s32.totalorder %s157, %s159
      %p166 = scmp.eq.s32.totalorder %s23, 1
      %p167 = por %p165, %p166
      %p168 = scmp.ne.s32.totalorder %s159, %s160
      %p169 = scmp.eq.s32.totalorder %s23, 0
      %p170 = por %p168, %p169
      %p171 = scmp.ne.s32.totalorder %s159, %s160
      %p172 = scmp.eq.s32.totalorder %s24, 1
      %p173 = por %p171, %p172
      %p175 = scmp.ne.s32.totalorder %s160, %s174
      %p176 = scmp.eq.s32.totalorder %s24, 0
      %p177 = por %p175, %p176
      %s179 = sadd.s32 %s178, 1
      %p182 = scmp.eq.s32.totalorder %s18, 1
      %p183 = scmp.ne.s32.totalorder %s178, %s180
      %p184 = scmp.eq.s32.totalorder %s18, 0
      %p185 = por %p183, %p184
      %p186 = scmp.ne.s32.totalorder %s178, %s180
      %p187 = scmp.eq.s32.totalorder %s23, 1
      %p188 = por %p186, %p187
      %p189 = scmp.ne.s32.totalorder %s180, %s181
      %p190 = scmp.eq.s32.totalorder %s23, 0
      %p191 = por %p189, %p190
      %p192 = scmp.ne.s32.totalorder %s180, %s181
      %p193 = scmp.eq.s32.totalorder %s24, 1
      %p194 = por %p192, %p193
      %p196 = scmp.ne.s32.totalorder %s181, %s195
      %p197 = scmp.eq.s32.totalorder %s24, 0
      %p198 = por %p196, %p197
      %s199 = ssub.s32 %s18, %s25
      %p200 = scmp.eq.s32.totalorder %s199, 0
      %s202 = sadd.s32 %s201, 1
      %s203 = scalar_select %p200, %s201, %s202
      %p206 = pneg %p200
      %p207 = scmp.eq.s32.totalorder %s18, 1
      %p208 = por %p206, %p207
      %p209 = scmp.ne.s32.totalorder %s201, %s204
      %p210 = scmp.eq.s32.totalorder %s18, 0
      %p211 = por %p209, %p210
      %p212 = scmp.ne.s32.totalorder %s201, %s204
      %p213 = scmp.eq.s32.totalorder %s23, 1
      %p214 = por %p212, %p213
      %p215 = scmp.ne.s32.totalorder %s204, %s205
      %p216 = scmp.eq.s32.totalorder %s23, 0
      %p217 = por %p215, %p216
      %p218 = scmp.ne.s32.totalorder %s204, %s205
      %p219 = scmp.eq.s32.totalorder %s24, 1
      %p220 = por %p218, %p219
      %p222 = scmp.ne.s32.totalorder %s205, %s221
      %p223 = scmp.eq.s32.totalorder %s24, 0
      %p224 = por %p222, %p223
      %p225 = scmp.le.s32.totalorder 1, %s18
      %p226 = scmp.lt.s32.totalorder %s18, 3
      %p227 = pnand %p225, %p226
      %p228 = pneg %p227
      // Predicated region
      $region9: #{tpu_custom_call.1} parent=5 // pred_check
        _
      $region10: #{tpu_custom_call.1} parent=5 // pred_check_branch
        %230 = sbr.rel (%p227) target = $region12
      $region11: #{tpu_custom_call.1} parent=5 // pred_region
        %s231 = ssub.s32 %s18, 1
        // Predicated region
        $region13: #{tpu_custom_call.1} parent=11 // pred_check
          %p232 = pneg %p39
        $region14: #{tpu_custom_call.1} parent=11 // pred_check_branch
          %234 = sbr.rel (%p232) target = $region16
        $region15: #{tpu_custom_call.1} parent=11 // pred_region
          %s236 = ssub.s32 16, 16
          %237 = vsyncadd [#allocation4], %s236
          %s239 = sshll.u32 %s0, 4
          %s240 = int_to_ptr.vmem [resolvable:$true] %s239
          %242 = dma.vmem_to_smem %s240, 16, [#allocation2], [#allocation4]
        $region16: #{tpu_custom_call.1} parent=11 // pred_fallthru
          _
        // Predicated region
        $region17: #{tpu_custom_call.1} parent=11 // pred_check
          %p243 = pneg %p86
        $region18: #{tpu_custom_call.1} parent=11 // pred_check_branch
          %245 = sbr.rel (%p243) target = $region20
        $region19: #{tpu_custom_call.1} parent=11 // pred_region
          _
        $region20: #{tpu_custom_call.1} parent=11 // pred_fallthru
          _
        // Predicated region
        $region21: #{tpu_custom_call.1} parent=11 // pred_check
          %p246 = pneg %p107
        $region22: #{tpu_custom_call.1} parent=11 // pred_check_branch
          %248 = sbr.rel (%p246) target = $region24
        $region23: #{tpu_custom_call.1} parent=11 // pred_region
          _
        $region24: #{tpu_custom_call.1} parent=11 // pred_fallthru
          _
        // Predicated region
        $region25: #{tpu_custom_call.1} parent=11 // pred_check
          %p249 = pneg %p128
        $region26: #{tpu_custom_call.1} parent=11 // pred_check_branch
          %251 = sbr.rel (%p249) target = $region28
        $region27: #{tpu_custom_call.1} parent=11 // pred_region
          _
        $region28: #{tpu_custom_call.1} parent=11 // pred_fallthru
          _
        // Predicated region
        $region29: #{tpu_custom_call.1} parent=11 // pred_check
          %p252 = pneg %p149
        $region30: #{tpu_custom_call.1} parent=11 // pred_check_branch
          %254 = sbr.rel (%p252) target = $region32
        $region31: #{tpu_custom_call.1} parent=11 // pred_region
          _
        $region32: #{tpu_custom_call.1} parent=11 // pred_fallthru
          _
        // Predicated region
        $region33: #{tpu_custom_call.1} parent=11 // pred_check
          %p255 = pneg %p170
        $region34: #{tpu_custom_call.1} parent=11 // pred_check_branch
          %257 = sbr.rel (%p255) target = $region36
        $region35: #{tpu_custom_call.1} parent=11 // pred_region
          _
        $region36: #{tpu_custom_call.1} parent=11 // pred_fallthru
          _
        // Predicated region
        $region37: #{tpu_custom_call.1} parent=11 // pred_check
          %p258 = pneg %p191
        $region38: #{tpu_custom_call.1} parent=11 // pred_check_branch
          %260 = sbr.rel (%p258) target = $region40
        $region39: #{tpu_custom_call.1} parent=11 // pred_region
          _
        $region40: #{tpu_custom_call.1} parent=11 // pred_fallthru
          _
      $region12: #{tpu_custom_call.1} parent=5 // pred_fallthru
        _
      %p261 = scmp.lt.s32.totalorder %s18, 2
      // Predicated region
      $region41: #{tpu_custom_call.1} parent=5 // pred_check
        %p262 = pneg %p261
      $region42: #{tpu_custom_call.1} parent=5 // pred_check_branch
        %264 = sbr.rel (%p262) target = $region44
      $region43: #{tpu_custom_call.1} parent=5 // pred_region
        // Predicated region
        $region45: #{tpu_custom_call.1} parent=43 // pred_check
          %p265 = pneg %p59
        $region46: #{tpu_custom_call.1} parent=43 // pred_check_branch
          %267 = sbr.rel (%p265) target = $region48
        $region47: #{tpu_custom_call.1} parent=43 // pred_region
          %p268 = scmp.lt.s32.totalorder %s18, 1
          %s269 = scalar_select %p268, %s18, 1
          %s270 = smul.addr %s269, 2
          %s271 = smul.addr %s270, 4
          %s272 = scalar_lea.vmem %s1, %s271
        $region48: #{tpu_custom_call.1} parent=43 // pred_fallthru
          _
      $region44: #{tpu_custom_call.1} parent=5 // pred_fallthru
        _
      %p273 = scmp.le.s32.totalorder 1, %s18
      %p274 = scmp.lt.s32.totalorder %s18, 3
      %p275 = pnand %p273, %p274
      %p276 = pneg %p275
      // Predicated region
      $region49: #{tpu_custom_call.1} parent=5 // pred_check
        _
      $region50: #{tpu_custom_call.1} parent=5 // pred_check_branch
        %278 = sbr.rel (%p275) target = $region52
      $region51: #{tpu_custom_call.1} parent=5 // pred_region
        %s279 = ssub.s32 %s18, 1
        // Predicated region
        $region53: #{tpu_custom_call.1} parent=51 // pred_check
          %p280 = pneg %p39
        $region54: #{tpu_custom_call.1} parent=51 // pred_check_branch
          %282 = sbr.rel (%p280) target = $region56
        $region55: #{tpu_custom_call.1} parent=51 // pred_region
          %283 = dma.done [#allocation4], 16
        $region56: #{tpu_custom_call.1} parent=51 // pred_fallthru
          _
        %284 = sfence
        %p285 = pneg %p39
        %p286 = pneg %p36
        %p287 = scmp.lt.s32.totalorder %s23, 1
        %s288 = scalar_select %p287, %s23, 1
        %s289 = smul.addr %s288, 2
        %s290 = smul.addr %s289, 4
        %s291 = scalar_lea.vmem %s1, %s290
        %p292 = pneg %p65
        %p293 = pneg %p62
        %p294 = pneg %p86
        %p295 = pneg %p83
        %p296 = pneg %p107
        %p297 = pneg %p104
        %p298 = pneg %p128
        %p299 = pneg %p125
        %p300 = pneg %p149
        %p301 = pneg %p146
        %p302 = pneg %p170
        %p303 = pneg %p167
        %p304 = pneg %p191
        %p305 = pneg %p188
        %p306 = pneg %p217
        %p307 = pneg %p214
        %s308 = sand.u32 %s204, 1
        %s309 = scalar_lea.sflag [#allocation3], %s308
        %s310 = sand.u32 %s204, 1
        %s311 = smul.addr %s310, 8
        %s312 = scalar_lea.vmem [#allocation5], %s311
        %p313 = scmp.lt.s32.totalorder %s23, 1
        %s314 = scalar_select %p313, %s23, 1
        %s315 = smul.addr %s314, 2
        %s316 = smul.addr %s315, 4
        %s317 = scalar_lea.vmem %s1, %s316
        %v318 = vlaneseq
        %v319 = vand.u32 %v318, 127
        %v320 = vadd.s32 %v319, 128
        %v321 = vand.u32 %v319, 15
        %v322 = vand.u32 %v320, 15
        %v323 = vshra.s32 %v319, 4
        %v324 = vshra.s32 %v320, 4
        %v325 = vld [vmem:[%s317] sm:$0xff]
        %v326 = vld [vmem:[%s2] sm:$0xf]
        %v328 = vcombine.high %v325, %v325
        %330 = vrot.lane.b32.xlu0 %v325, 17
        %v331 = vpop.permute.xlu0 %330
        %332 = vrot.lane.b32.xlu0 %v328, 17
        %v333 = vpop.permute.xlu0 %332
        %vm334 = vcmp.lt.s32.totalorder %v319, 17
        %v335 = vsel %vm334, %v331, %v333
        %v336 = vsel %vm334, %v333, %v331
        %vm337 = vcmp.ge.s32.totalorder %v323, 1
        %vm338 = vcmp.ge.s32.totalorder %v324, 1
        %vm339 = vcmp.lt.s32.totalorder %v323, 17
        %vm340 = vcmp.lt.s32.totalorder %v324, 17
        %vm341 = vmand %vm337, %vm339
        %vm342 = vmand %vm338, %vm340
        %vm343 = vcmp.ge.s32.totalorder %v321, 1
        %vm344 = vcmp.ge.s32.totalorder %v322, 1
        %vm345 = vmand %vm341, %vm343
        %vm346 = vmand %vm342, %vm344
        %vm347 = vcmp.lt.s32.totalorder %v321, 17
        %vm348 = vcmp.lt.s32.totalorder %v322, 17
        %vm349 = vmand %vm345, %vm347
        %vm350 = vmand %vm346, %vm348
        %v351 = vsel %vm349, 1, 0
        %v352 = vsel %vm350, 1, 0
        %vm353 = vcmp.eq.s32.totalorder %v351, 1
        %vm354 = vcmp.eq.s32.totalorder %v352, 1
        %v355 = vsel %vm353, %v336, 0.0
        %v356 = vsel %vm354, %v335, 0.0
        %357 = vrot.lane.b32.xlu0 %v325, 16
        %v358 = vpop.permute.xlu0 %357
        %359 = vrot.lane.b32.xlu0 %v328, 16
        %v360 = vpop.permute.xlu0 %359
        %vm361 = vcmp.lt.s32.totalorder %v319, 16
        %v362 = vsel %vm361, %v358, %v360
        %v363 = vsel %vm361, %v360, %v358
        %vm364 = vcmp.ge.s32.totalorder %v321, 0
        %vm365 = vcmp.ge.s32.totalorder %v322, 0
        %vm366 = vmand %vm341, %vm364
        %vm367 = vmand %vm342, %vm365
        %vm368 = vcmp.lt.s32.totalorder %v321, 16
        %vm369 = vcmp.lt.s32.totalorder %v322, 16
        %vm370 = vmand %vm366, %vm368
        %vm371 = vmand %vm367, %vm369
        %v372 = vsel %vm370, 1, 0
        %v373 = vsel %vm371, 1, 0
        %vm374 = vcmp.eq.s32.totalorder %v372, 1
        %vm375 = vcmp.eq.s32.totalorder %v373, 1
        %v376 = vsel %vm374, %v363, 0.0
        %v377 = vsel %vm375, %v362, 0.0
        %378 = vrot.lane.b32.xlu0 %v325, 15
        %v379 = vpop.permute.xlu0 %378
        %380 = vrot.lane.b32.xlu0 %v328, 15
        %v381 = vpop.permute.xlu0 %380
        %vm382 = vcmp.lt.s32.totalorder %v319, 15
        %v383 = vsel %vm382, %v379, %v381
        %v384 = vsel %vm382, %v381, %v379
        %vm385 = vcmp.ge.s32.totalorder %v321, 4294967295
        %vm386 = vcmp.ge.s32.totalorder %v322, 4294967295
        %vm387 = vmand %vm341, %vm385
        %vm388 = vmand %vm342, %vm386
        %vm389 = vcmp.lt.s32.totalorder %v321, 15
        %vm390 = vcmp.lt.s32.totalorder %v322, 15
        %vm391 = vmand %vm387, %vm389
        %vm392 = vmand %vm388, %vm390
        %v393 = vsel %vm391, 1, 0
        %v394 = vsel %vm392, 1, 0
        %vm395 = vcmp.eq.s32.totalorder %v393, 1
        %vm396 = vcmp.eq.s32.totalorder %v394, 1
        %v397 = vsel %vm395, %v384, 0.0
        %v398 = vsel %vm396, %v383, 0.0
        %399 = vrot.lane.b32.xlu0 %v325, 1
        %v400 = vpop.permute.xlu0 %399
        %401 = vrot.lane.b32.xlu0 %v328, 1
        %v402 = vpop.permute.xlu0 %401
        %vm403 = vcmp.lt.s32.totalorder %v319, 1
        %v404 = vsel %vm403, %v400, %v402
        %v405 = vsel %vm403, %v402, %v400
        %vm406 = vcmp.ge.s32.totalorder %v323, 0
        %vm407 = vcmp.ge.s32.totalorder %v324, 0
        %vm408 = vcmp.lt.s32.totalorder %v323, 16
        %vm409 = vcmp.lt.s32.totalorder %v324, 16
        %vm410 = vmand %vm406, %vm408
        %vm411 = vmand %vm407, %vm409
        %vm412 = vmand %vm410, %vm343
        %vm413 = vmand %vm411, %vm344
        %vm414 = vmand %vm412, %vm347
        %vm415 = vmand %vm413, %vm348
        %v416 = vsel %vm414, 1, 0
        %v417 = vsel %vm415, 1, 0
        %vm418 = vcmp.eq.s32.totalorder %v416, 1
        %vm419 = vcmp.eq.s32.totalorder %v417, 1
        %v420 = vsel %vm418, %v405, 0.0
        %v421 = vsel %vm419, %v404, 0.0
        %422 = vrot.lane.b32.xlu0 %v325, 127
        %v423 = vpop.permute.xlu0 %422
        %424 = vrot.lane.b32.xlu0 %v328, 127
        %v425 = vpop.permute.xlu0 %424
        %vm426 = vcmp.lt.s32.totalorder %v319, 127
        %v427 = vsel %vm426, %v423, %v425
        %v428 = vsel %vm426, %v425, %v423
        %vm429 = vmand %vm410, %vm385
        %vm430 = vmand %vm411, %vm386
        %vm431 = vmand %vm429, %vm389
        %vm432 = vmand %vm430, %vm390
        %v433 = vsel %vm431, 1, 0
        %v434 = vsel %vm432, 1, 0
        %vm435 = vcmp.eq.s32.totalorder %v433, 1
        %vm436 = vcmp.eq.s32.totalorder %v434, 1
        %v437 = vsel %vm435, %v427, 0.0
        %v438 = vsel %vm436, %v428, 0.0
        %439 = vrot.lane.b32.xlu0 %v325, 113
        %v440 = vpop.permute.xlu0 %439
        %441 = vrot.lane.b32.xlu0 %v328, 113
        %v442 = vpop.permute.xlu0 %441
        %vm443 = vcmp.lt.s32.totalorder %v319, 113
        %v444 = vsel %vm443, %v440, %v442
        %v445 = vsel %vm443, %v442, %v440
        %vm446 = vcmp.ge.s32.totalorder %v323, 4294967295
        %vm447 = vcmp.ge.s32.totalorder %v324, 4294967295
        %vm448 = vcmp.lt.s32.totalorder %v323, 15
        %vm449 = vcmp.lt.s32.totalorder %v324, 15
        %vm450 = vmand %vm446, %vm448
        %vm451 = vmand %vm447, %vm449
        %vm452 = vmand %vm450, %vm343
        %vm453 = vmand %vm451, %vm344
        %vm454 = vmand %vm452, %vm347
        %vm455 = vmand %vm453, %vm348
        %v456 = vsel %vm454, 1, 0
        %v457 = vsel %vm455, 1, 0
        %vm458 = vcmp.eq.s32.totalorder %v456, 1
        %vm459 = vcmp.eq.s32.totalorder %v457, 1
        %v460 = vsel %vm458, %v444, 0.0
        %v461 = vsel %vm459, %v445, 0.0
        %462 = vrot.lane.b32.xlu0 %v325, 112
        %v463 = vpop.permute.xlu0 %462
        %464 = vrot.lane.b32.xlu0 %v328, 112
        %v465 = vpop.permute.xlu0 %464
        %vm466 = vcmp.lt.s32.totalorder %v319, 112
        %v467 = vsel %vm466, %v463, %v465
        %v468 = vsel %vm466, %v465, %v463
        %vm469 = vmand %vm450, %vm364
        %vm470 = vmand %vm451, %vm365
        %vm471 = vmand %vm469, %vm368
        %vm472 = vmand %vm470, %vm369
        %v473 = vsel %vm471, 1, 0
        %v474 = vsel %vm472, 1, 0
        %vm475 = vcmp.eq.s32.totalorder %v473, 1
        %vm476 = vcmp.eq.s32.totalorder %v474, 1
        %v477 = vsel %vm475, %v467, 0.0
        %v478 = vsel %vm476, %v468, 0.0
        %479 = vrot.lane.b32.xlu0 %v325, 111
        %v480 = vpop.permute.xlu0 %479
        %481 = vrot.lane.b32.xlu0 %v328, 111
        %v482 = vpop.permute.xlu0 %481
        %vm483 = vcmp.lt.s32.totalorder %v319, 111
        %v484 = vsel %vm483, %v480, %v482
        %v485 = vsel %vm483, %v482, %v480
        %vm486 = vmand %vm450, %vm385
        %vm487 = vmand %vm451, %vm386
        %vm488 = vmand %vm486, %vm389
        %vm489 = vmand %vm487, %vm390
        %v490 = vsel %vm488, 1, 0
        %v491 = vsel %vm489, 1, 0
        %vm492 = vcmp.eq.s32.totalorder %v490, 1
        %vm493 = vcmp.eq.s32.totalorder %v491, 1
        %v494 = vsel %vm492, %v484, 0.0
        %v495 = vsel %vm493, %v485, 0.0
        %v498 = vrot.slane %v376, 4
        %v499 = vrot.slane %v377, 4
        %v504 = vrot.slane %v420, 4
        %v505 = vrot.slane %v421, 4
        %v510 = vrot.slane %v437, 4
        %v511 = vrot.slane %v438, 4
        %v516 = vrot.slane %v477, 4
        %v517 = vrot.slane %v478, 4
        %vm520 = vcmask 1043456
        %v521 = vsel %vm520, %v355, %v498
        %v522 = vsel %vm520, %v356, %v499
        %v523 = vsel %vm520, %v397, %v504
        %v524 = vsel %vm520, %v398, %v505
        %v525 = vsel %vm520, %v325, %v510
        %v526 = vsel %vm520, %v328, %v511
        %v527 = vsel %vm520, %v460, %v516
        %v528 = vsel %vm520, %v461, %v517
        %v529 = vld [vmem:[%s3] sm:$0xf]
        %531 = vset.pattern.permute.xlu0 0
        %532 = vperm.xlu0 %531, %v529
        %v533 = vpop.permute.xlu0 %532
        %vm535 = vcmask 293888
        %v537 = vsel %vm535, %v326, 0
        %v540 = vsel %vm520, %v494, 0
        %v543 = vsel %vm520, %v495, 0
        %545 = vmatprep.subr.mxu0 %v522
        %546 = vmatpush1.msra.mxu0 %v521
        %547 = vmatprep.subr.mxu0 %v524
        %548 = vmatpush1.msra.mxu0 %v523
        %549 = vmatprep.subr.mxu0 %v526
        %550 = vmatpush1.msra.mxu0 %v525
        %551 = vmatprep.subr.mxu0 %v528
        %552 = vmatpush1.msra.mxu0 %v527
        %553 = vmatprep.subr.mxu0 %v543
        %554 = vmatpush1.msra.mxu0 %v540
        %555 = vmatprep.subr.mxu0 0.0
        %556 = vmatpush1.msra.mxu0 0.0
        %557 = vmatprep.subr.mxu0 0.0
        %558 = vmatpush1.msra.mxu0 0.0
        %559 = vmatprep.subr.mxu0 0.0
        %560 = vmatpush1.msra.mxu0 0.0
        %561 = vmatprep.subr.mxu0 0.0
        %562 = vmatpush1.msra.mxu0 0.0
        %563 = vmatprep.subr.mxu0 0.0
        %564 = vmatpush1.msra.mxu0 0.0
        %565 = vmatprep.subr.mxu0 0.0
        %566 = vmatpush1.msra.mxu0 0.0
        %567 = vmatprep.subr.mxu0 0.0
        %568 = vmatpush1.msra.mxu0 0.0
        %569 = vmatprep.subr.mxu0 0.0
        %570 = vmatpush1.msra.mxu0 0.0
        %571 = vmatprep.subr.mxu0 0.0
        %572 = vmatpush1.msra.mxu0 0.0
        %573 = vmatprep.subr.mxu0 0.0
        %574 = vmatpush1.msra.mxu0 0.0
        %575 = vmatprep.subr.mxu0 0.0
        %576 = vmatpush1.msra.mxu0 0.0
        %577 = vmatprep.subr.mxu0 0.0
        %578 = vmatpush1.msra.mxu0 0.0
        %579 = vmatprep.subr.mxu0 0.0
        %580 = vmatpush1.msra.mxu0 0.0
        %581 = vmatprep.subr.mxu0 0.0
        %582 = vmatpush1.msra.mxu0 0.0
        %583 = vmatprep.subr.mxu0 0.0
        %584 = vmatpush1.msra.mxu0 0.0
        %585 = vmatprep.subr.mxu0 0.0
        %586 = vmatpush1.msra.mxu0 0.0
        %587 = vmatprep.subr.mxu0 0.0
        %588 = vmatpush1.msra.mxu0 0.0
        %589 = vmatprep.subr.mxu0 0.0
        %590 = vmatpush1.msra.mxu0 0.0
        %591 = vmatprep.subr.mxu0 0.0
        %592 = vmatpush1.msra.mxu0 0.0
        %593 = vmatprep.subr.mxu0 0.0
        %594 = vmatpush1.msra.mxu0 0.0
        %595 = vmatprep.subr.mxu0 0.0
        %596 = vmatpush1.msra.mxu0 0.0
        %597 = vmatprep.subr.mxu0 0.0
        %598 = vmatpush1.msra.mxu0 0.0
        %599 = vmatprep.subr.mxu0 0.0
        %600 = vmatpush1.msra.mxu0 0.0
        %601 = vmatprep.subr.mxu0 0.0
        %602 = vmatpush1.msra.mxu0 0.0
        %603 = vmatprep.subr.mxu0 0.0
        %604 = vmatpush1.msra.mxu0 0.0
        %605 = vmatprep.subr.mxu0 0.0
        %606 = vmatpush1.msra.mxu0 0.0
        %607 = vmatprep.subr.mxu0 0.0
        %608 = vmatpush1.msra.mxu0 0.0
        %609 = vmatprep.mubr.f32.mxu0 0.0
        %610 = vmatmul.mubr.f32.gmra.mrb[0].mxu0 %v537
        %v611 = vpop.f32.mrb[0].mxu0
        %v612 = vadd.f32 %v533, %v611
        %v613 = vpop.f32.mrb[0].mxu0
        %v614 = vadd.f32 %v533, %v613
        %615 = vdwg.mxu0
        %s616 = sld [smem:[#allocation2]]
        %vm617 = vcmp.ge.f32.partialorder %v612, 0.0
        %vm618 = vcmp.ge.f32.partialorder %v614, 0.0
        %v619 = vstv %s616
        %v620 = vmul.f32 %v619, %v612
        %v621 = vmul.f32 %v619, %v614
        %v622 = vsel %vm617, %v612, %v620
        %v623 = vsel %vm618, %v614, %v621
        %v624 = vld [vmem:[%s4] sm:$0xf]
        %625 = vrot.lane.b32.xlu0 %v622, 17
        %v626 = vpop.permute.xlu0 %625
        %627 = vrot.lane.b32.xlu0 %v623, 17
        %v628 = vpop.permute.xlu0 %627
        %v629 = vsel %vm334, %v626, %v628
        %v630 = vsel %vm334, %v628, %v626
        %v631 = vsel %vm353, %v630, 0.0
        %v632 = vsel %vm354, %v629, 0.0
        %633 = vrot.lane.b32.xlu0 %v622, 16
        %v634 = vpop.permute.xlu0 %633
        %635 = vrot.lane.b32.xlu0 %v623, 16
        %v636 = vpop.permute.xlu0 %635
        %v637 = vsel %vm361, %v634, %v636
        %v638 = vsel %vm361, %v636, %v634
        %v639 = vsel %vm374, %v638, 0.0
        %v640 = vsel %vm375, %v637, 0.0
        %641 = vrot.lane.b32.xlu0 %v622, 15
        %v642 = vpop.permute.xlu0 %641
        %643 = vrot.lane.b32.xlu0 %v623, 15
        %v644 = vpop.permute.xlu0 %643
        %v645 = vsel %vm382, %v642, %v644
        %v646 = vsel %vm382, %v644, %v642
        %v647 = vsel %vm395, %v646, 0.0
        %v648 = vsel %vm396, %v645, 0.0
        %649 = vrot.lane.b32.xlu0 %v622, 1
        %v650 = vpop.permute.xlu0 %649
        %651 = vrot.lane.b32.xlu0 %v623, 1
        %v652 = vpop.permute.xlu0 %651
        %v653 = vsel %vm403, %v650, %v652
        %v654 = vsel %vm403, %v652, %v650
        %v655 = vsel %vm418, %v654, 0.0
        %v656 = vsel %vm419, %v653, 0.0
        %657 = vrot.lane.b32.xlu0 %v622, 127
        %v658 = vpop.permute.xlu0 %657
        %659 = vrot.lane.b32.xlu0 %v623, 127
        %v660 = vpop.permute.xlu0 %659
        %v661 = vsel %vm426, %v658, %v660
        %v662 = vsel %vm426, %v660, %v658
        %v663 = vsel %vm435, %v661, 0.0
        %v664 = vsel %vm436, %v662, 0.0
        %665 = vrot.lane.b32.xlu0 %v622, 113
        %v666 = vpop.permute.xlu0 %665
        %667 = vrot.lane.b32.xlu0 %v623, 113
        %v668 = vpop.permute.xlu0 %667
        %v669 = vsel %vm443, %v666, %v668
        %v670 = vsel %vm443, %v668, %v666
        %v671 = vsel %vm458, %v669, 0.0
        %v672 = vsel %vm459, %v670, 0.0
        %673 = vrot.lane.b32.xlu0 %v622, 112
        %v674 = vpop.permute.xlu0 %673
        %675 = vrot.lane.b32.xlu0 %v623, 112
        %v676 = vpop.permute.xlu0 %675
        %v677 = vsel %vm466, %v674, %v676
        %v678 = vsel %vm466, %v676, %v674
        %v679 = vsel %vm475, %v677, 0.0
        %v680 = vsel %vm476, %v678, 0.0
        %681 = vrot.lane.b32.xlu0 %v622, 111
        %v682 = vpop.permute.xlu0 %681
        %683 = vrot.lane.b32.xlu0 %v623, 111
        %v684 = vpop.permute.xlu0 %683
        %v685 = vsel %vm483, %v682, %v684
        %v686 = vsel %vm483, %v684, %v682
        %v687 = vsel %vm492, %v685, 0.0
        %v688 = vsel %vm493, %v686, 0.0
        %v691 = vrot.slane %v639, 4
        %v692 = vrot.slane %v640, 4
        %v697 = vrot.slane %v655, 4
        %v698 = vrot.slane %v656, 4
        %v703 = vrot.slane %v663, 4
        %v704 = vrot.slane %v664, 4
        %v709 = vrot.slane %v679, 4
        %v710 = vrot.slane %v680, 4
        %v713 = vsel %vm520, %v631, %v691
        %v714 = vsel %vm520, %v632, %v692
        %v715 = vsel %vm520, %v647, %v697
        %v716 = vsel %vm520, %v648, %v698
        %v717 = vsel %vm520, %v622, %v703
        %v718 = vsel %vm520, %v623, %v704
        %v719 = vsel %vm520, %v671, %v709
        %v720 = vsel %vm520, %v672, %v710
        %v721 = vld [vmem:[%s5] sm:$0xf]
        %723 = vset.pattern.permute.xlu0 0
        %724 = vperm.xlu0 %723, %v721
        %v725 = vpop.permute.xlu0 %724
        %v728 = vsel %vm535, %v624, 0
        %v731 = vsel %vm520, %v687, 0
        %v734 = vsel %vm520, %v688, 0
        %736 = vmatprep.subr.mxu0 %v714
        %737 = vmatpush1.msra.mxu0 %v713
        %738 = vmatprep.subr.mxu0 %v716
        %739 = vmatpush1.msra.mxu0 %v715
        %740 = vmatprep.subr.mxu0 %v718
        %741 = vmatpush1.msra.mxu0 %v717
        %742 = vmatprep.subr.mxu0 %v720
        %743 = vmatpush1.msra.mxu0 %v719
        %744 = vmatprep.subr.mxu0 %v734
        %745 = vmatpush1.msra.mxu0 %v731
        %746 = vmatprep.subr.mxu0 0.0
        %747 = vmatpush1.msra.mxu0 0.0
        %748 = vmatprep.subr.mxu0 0.0
        %749 = vmatpush1.msra.mxu0 0.0
        %750 = vmatprep.subr.mxu0 0.0
        %751 = vmatpush1.msra.mxu0 0.0
        %752 = vmatprep.subr.mxu0 0.0
        %753 = vmatpush1.msra.mxu0 0.0
        %754 = vmatprep.subr.mxu0 0.0
        %755 = vmatpush1.msra.mxu0 0.0
        %756 = vmatprep.subr.mxu0 0.0
        %757 = vmatpush1.msra.mxu0 0.0
        %758 = vmatprep.subr.mxu0 0.0
        %759 = vmatpush1.msra.mxu0 0.0
        %760 = vmatprep.subr.mxu0 0.0
        %761 = vmatpush1.msra.mxu0 0.0
        %762 = vmatprep.subr.mxu0 0.0
        %763 = vmatpush1.msra.mxu0 0.0
        %764 = vmatprep.subr.mxu0 0.0
        %765 = vmatpush1.msra.mxu0 0.0
        %766 = vmatprep.subr.mxu0 0.0
        %767 = vmatpush1.msra.mxu0 0.0
        %768 = vmatprep.subr.mxu0 0.0
        %769 = vmatpush1.msra.mxu0 0.0
        %770 = vmatprep.subr.mxu0 0.0
        %771 = vmatpush1.msra.mxu0 0.0
        %772 = vmatprep.subr.mxu0 0.0
        %773 = vmatpush1.msra.mxu0 0.0
        %774 = vmatprep.subr.mxu0 0.0
        %775 = vmatpush1.msra.mxu0 0.0
        %776 = vmatprep.subr.mxu0 0.0
        %777 = vmatpush1.msra.mxu0 0.0
        %778 = vmatprep.subr.mxu0 0.0
        %779 = vmatpush1.msra.mxu0 0.0
        %780 = vmatprep.subr.mxu0 0.0
        %781 = vmatpush1.msra.mxu0 0.0
        %782 = vmatprep.subr.mxu0 0.0
        %783 = vmatpush1.msra.mxu0 0.0
        %784 = vmatprep.subr.mxu0 0.0
        %785 = vmatpush1.msra.mxu0 0.0
        %786 = vmatprep.subr.mxu0 0.0
        %787 = vmatpush1.msra.mxu0 0.0
        %788 = vmatprep.subr.mxu0 0.0
        %789 = vmatpush1.msra.mxu0 0.0
        %790 = vmatprep.subr.mxu0 0.0
        %791 = vmatpush1.msra.mxu0 0.0
        %792 = vmatprep.subr.mxu0 0.0
        %793 = vmatpush1.msra.mxu0 0.0
        %794 = vmatprep.subr.mxu0 0.0
        %795 = vmatpush1.msra.mxu0 0.0
        %796 = vmatprep.subr.mxu0 0.0
        %797 = vmatpush1.msra.mxu0 0.0
        %798 = vmatprep.subr.mxu0 0.0
        %799 = vmatpush1.msra.mxu0 0.0
        %800 = vmatprep.mubr.f32.mxu0 0.0
        %801 = vmatmul.mubr.f32.gmra.mrb[0].mxu0 %v728
        %v802 = vpop.f32.mrb[0].mxu0
        %v803 = vadd.f32 %v725, %v802
        %v804 = vpop.f32.mrb[0].mxu0
        %v805 = vadd.f32 %v725, %v804
        %806 = vdwg.mxu0
        %s807 = sld [smem:[#allocation2 + $0x1]]
        %vm808 = vcmp.ge.f32.partialorder %v803, 0.0
        %vm809 = vcmp.ge.f32.partialorder %v805, 0.0
        %v810 = vstv %s807
        %v811 = vmul.f32 %v810, %v803
        %v812 = vmul.f32 %v810, %v805
        %v813 = vsel %vm808, %v803, %v811
        %v814 = vsel %vm809, %v805, %v812
        %v815 = vld [vmem:[%s6] sm:$0xf]
        %816 = vrot.lane.b32.xlu0 %v813, 17
        %v817 = vpop.permute.xlu0 %816
        %818 = vrot.lane.b32.xlu0 %v814, 17
        %v819 = vpop.permute.xlu0 %818
        %v820 = vsel %vm334, %v817, %v819
        %v821 = vsel %vm334, %v819, %v817
        %v822 = vsel %vm353, %v821, 0.0
        %v823 = vsel %vm354, %v820, 0.0
        %824 = vrot.lane.b32.xlu0 %v813, 16
        %v825 = vpop.permute.xlu0 %824
        %826 = vrot.lane.b32.xlu0 %v814, 16
        %v827 = vpop.permute.xlu0 %826
        %v828 = vsel %vm361, %v825, %v827
        %v829 = vsel %vm361, %v827, %v825
        %v830 = vsel %vm374, %v829, 0.0
        %v831 = vsel %vm375, %v828, 0.0
        %832 = vrot.lane.b32.xlu0 %v813, 15
        %v833 = vpop.permute.xlu0 %832
        %834 = vrot.lane.b32.xlu0 %v814, 15
        %v835 = vpop.permute.xlu0 %834
        %v836 = vsel %vm382, %v833, %v835
        %v837 = vsel %vm382, %v835, %v833
        %v838 = vsel %vm395, %v837, 0.0
        %v839 = vsel %vm396, %v836, 0.0
        %840 = vrot.lane.b32.xlu0 %v813, 1
        %v841 = vpop.permute.xlu0 %840
        %842 = vrot.lane.b32.xlu0 %v814, 1
        %v843 = vpop.permute.xlu0 %842
        %v844 = vsel %vm403, %v841, %v843
        %v845 = vsel %vm403, %v843, %v841
        %v846 = vsel %vm418, %v845, 0.0
        %v847 = vsel %vm419, %v844, 0.0
        %848 = vrot.lane.b32.xlu0 %v813, 127
        %v849 = vpop.permute.xlu0 %848
        %850 = vrot.lane.b32.xlu0 %v814, 127
        %v851 = vpop.permute.xlu0 %850
        %v852 = vsel %vm426, %v849, %v851
        %v853 = vsel %vm426, %v851, %v849
        %v854 = vsel %vm435, %v852, 0.0
        %v855 = vsel %vm436, %v853, 0.0
        %856 = vrot.lane.b32.xlu0 %v813, 113
        %v857 = vpop.permute.xlu0 %856
        %858 = vrot.lane.b32.xlu0 %v814, 113
        %v859 = vpop.permute.xlu0 %858
        %v860 = vsel %vm443, %v857, %v859
        %v861 = vsel %vm443, %v859, %v857
        %v862 = vsel %vm458, %v860, 0.0
        %v863 = vsel %vm459, %v861, 0.0
        %864 = vrot.lane.b32.xlu0 %v813, 112
        %v865 = vpop.permute.xlu0 %864
        %866 = vrot.lane.b32.xlu0 %v814, 112
        %v867 = vpop.permute.xlu0 %866
        %v868 = vsel %vm466, %v865, %v867
        %v869 = vsel %vm466, %v867, %v865
        %v870 = vsel %vm475, %v868, 0.0
        %v871 = vsel %vm476, %v869, 0.0
        %872 = vrot.lane.b32.xlu0 %v813, 111
        %v873 = vpop.permute.xlu0 %872
        %874 = vrot.lane.b32.xlu0 %v814, 111
        %v875 = vpop.permute.xlu0 %874
        %v876 = vsel %vm483, %v873, %v875
        %v877 = vsel %vm483, %v875, %v873
        %v878 = vsel %vm492, %v876, 0.0
        %v879 = vsel %vm493, %v877, 0.0
        %v882 = vrot.slane %v830, 4
        %v883 = vrot.slane %v831, 4
        %v888 = vrot.slane %v846, 4
        %v889 = vrot.slane %v847, 4
        %v894 = vrot.slane %v854, 4
        %v895 = vrot.slane %v855, 4
        %v900 = vrot.slane %v870, 4
        %v901 = vrot.slane %v871, 4
        %v904 = vsel %vm520, %v822, %v882
        %v905 = vsel %vm520, %v823, %v883
        %v906 = vsel %vm520, %v838, %v888
        %v907 = vsel %vm520, %v839, %v889
        %v908 = vsel %vm520, %v813, %v894
        %v909 = vsel %vm520, %v814, %v895
        %v910 = vsel %vm520, %v862, %v900
        %v911 = vsel %vm520, %v863, %v901
        %v912 = vld [vmem:[%s7] sm:$0xf]
        %914 = vset.pattern.permute.xlu0 0
        %915 = vperm.xlu0 %914, %v912
        %v916 = vpop.permute.xlu0 %915
        %v919 = vsel %vm535, %v815, 0
        %v922 = vsel %vm520, %v878, 0
        %v925 = vsel %vm520, %v879, 0
        %927 = vmatprep.subr.mxu0 %v905
        %928 = vmatpush1.msra.mxu0 %v904
        %929 = vmatprep.subr.mxu0 %v907
        %930 = vmatpush1.msra.mxu0 %v906
        %931 = vmatprep.subr.mxu0 %v909
        %932 = vmatpush1.msra.mxu0 %v908
        %933 = vmatprep.subr.mxu0 %v911
        %934 = vmatpush1.msra.mxu0 %v910
        %935 = vmatprep.subr.mxu0 %v925
        %936 = vmatpush1.msra.mxu0 %v922
        %937 = vmatprep.subr.mxu0 0.0
        %938 = vmatpush1.msra.mxu0 0.0
        %939 = vmatprep.subr.mxu0 0.0
        %940 = vmatpush1.msra.mxu0 0.0
        %941 = vmatprep.subr.mxu0 0.0
        %942 = vmatpush1.msra.mxu0 0.0
        %943 = vmatprep.subr.mxu0 0.0
        %944 = vmatpush1.msra.mxu0 0.0
        %945 = vmatprep.subr.mxu0 0.0
        %946 = vmatpush1.msra.mxu0 0.0
        %947 = vmatprep.subr.mxu0 0.0
        %948 = vmatpush1.msra.mxu0 0.0
        %949 = vmatprep.subr.mxu0 0.0
        %950 = vmatpush1.msra.mxu0 0.0
        %951 = vmatprep.subr.mxu0 0.0
        %952 = vmatpush1.msra.mxu0 0.0
        %953 = vmatprep.subr.mxu0 0.0
        %954 = vmatpush1.msra.mxu0 0.0
        %955 = vmatprep.subr.mxu0 0.0
        %956 = vmatpush1.msra.mxu0 0.0
        %957 = vmatprep.subr.mxu0 0.0
        %958 = vmatpush1.msra.mxu0 0.0
        %959 = vmatprep.subr.mxu0 0.0
        %960 = vmatpush1.msra.mxu0 0.0
        %961 = vmatprep.subr.mxu0 0.0
        %962 = vmatpush1.msra.mxu0 0.0
        %963 = vmatprep.subr.mxu0 0.0
        %964 = vmatpush1.msra.mxu0 0.0
        %965 = vmatprep.subr.mxu0 0.0
        %966 = vmatpush1.msra.mxu0 0.0
        %967 = vmatprep.subr.mxu0 0.0
        %968 = vmatpush1.msra.mxu0 0.0
        %969 = vmatprep.subr.mxu0 0.0
        %970 = vmatpush1.msra.mxu0 0.0
        %971 = vmatprep.subr.mxu0 0.0
        %972 = vmatpush1.msra.mxu0 0.0
        %973 = vmatprep.subr.mxu0 0.0
        %974 = vmatpush1.msra.mxu0 0.0
        %975 = vmatprep.subr.mxu0 0.0
        %976 = vmatpush1.msra.mxu0 0.0
        %977 = vmatprep.subr.mxu0 0.0
        %978 = vmatpush1.msra.mxu0 0.0
        %979 = vmatprep.subr.mxu0 0.0
        %980 = vmatpush1.msra.mxu0 0.0
        %981 = vmatprep.subr.mxu0 0.0
        %982 = vmatpush1.msra.mxu0 0.0
        %983 = vmatprep.subr.mxu0 0.0
        %984 = vmatpush1.msra.mxu0 0.0
        %985 = vmatprep.subr.mxu0 0.0
        %986 = vmatpush1.msra.mxu0 0.0
        %987 = vmatprep.subr.mxu0 0.0
        %988 = vmatpush1.msra.mxu0 0.0
        %989 = vmatprep.subr.mxu0 0.0
        %990 = vmatpush1.msra.mxu0 0.0
        %991 = vmatprep.mubr.f32.mxu0 0.0
        %992 = vmatmul.mubr.f32.gmra.mrb[0].mxu0 %v919
        %v993 = vpop.f32.mrb[0].mxu0
        %v994 = vadd.f32 %v916, %v993
        %v995 = vpop.f32.mrb[0].mxu0
        %v996 = vadd.f32 %v916, %v995
        %997 = vdwg.mxu0
        %v998 = vadd.f32 %v994, %v325
        %v999 = vadd.f32 %v996, %v328
        %v1002 = vcombine.low %v998, %v999
        %1004 = vst [vmem:[%s312] sm:$0xff] %v1002
        %s1005 = sand.u32 %s204, 1
        %s1006 = scalar_lea.sflag [#allocation3], %s1005
        %s1007 = sand.u32 %s204, 1
        %s1008 = smul.addr %s1007, 8
        %s1009 = scalar_lea.vmem [#allocation5], %s1008
        // Predicated region
        $region57: #{tpu_custom_call.1} parent=51 // pred_check
          %p1010 = pneg %p214
        $region58: #{tpu_custom_call.1} parent=51 // pred_check_branch
          %1012 = sbr.rel (%p1010) target = $region60
        $region59: #{tpu_custom_call.1} parent=51 // pred_region
          %s1014 = ssub.s32 128, 128
          %1015 = vsyncadd %s1006, %s1014
          %s1016 = smul.addr %s23, 2
          %s1017 = smul.addr %s1016, 64
          %s1018 = scalar_lea.hbm %s8, %s1017
          %s1020 = sshll.u32 %s1009, 4
          %s1021 = int_to_ptr.vmem [resolvable:$true] %s1020
          %1023 = dma.vmem_to_hbm [thread:$0]  %s1021, 128, %s1018, %s1006
        $region60: #{tpu_custom_call.1} parent=51 // pred_fallthru
          _
      $region52: #{tpu_custom_call.1} parent=5 // pred_fallthru
        _
      %p1024 = scmp.le.s32.totalorder 2, %s18
      // Predicated region
      $region61: #{tpu_custom_call.1} parent=5 // pred_check
        %p1025 = pneg %p1024
      $region62: #{tpu_custom_call.1} parent=5 // pred_check_branch
        %1027 = sbr.rel (%p1025) target = $region64
      $region63: #{tpu_custom_call.1} parent=5 // pred_region
        %s1028 = ssub.s32 %s18, 2
        // Predicated region
        $region65: #{tpu_custom_call.1} parent=63 // pred_check
          %p1029 = pneg %p220
        $region66: #{tpu_custom_call.1} parent=63 // pred_check_branch
          %1031 = sbr.rel (%p1029) target = $region68
        $region67: #{tpu_custom_call.1} parent=63 // pred_region
          %s1032 = sand.u32 %s205, 1
          %s1033 = scalar_lea.sflag [#allocation3], %s1032
          %s1034 = sand.u32 %s205, 1
          %s1035 = smul.addr %s1034, 8
          %s1036 = scalar_lea.vmem [#allocation5], %s1035
          %1037 = dma.done %s1033, 128
        $region68: #{tpu_custom_call.1} parent=63 // pred_fallthru
          _
      $region64: #{tpu_custom_call.1} parent=5 // pred_fallthru
        _
    $region6: #{tpu_custom_call.1} parent=1 // loop_footer
      %s22 = sadd.s32 1, %s18
    $region7: #{tpu_custom_call.1} parent=1 // loop_footer_branch
      %17 = sbr.rel target = $region3
    $region8: #{tpu_custom_call.1} parent=1 // loop_exit
      _
    %1038 = vsyncpa [#allocation3], 1
    %s1039 = scalar_lea.sflag [#allocation3], 1
    %1040 = vsyncpa %s1039, 1
    %1041 = vsyncpa [#allocation4], 1
    %s1042 = scalar_lea.sflag [#allocation4], 1
    %1043 = vsyncpa %s1042, 1

</llo_original>
